<compile_context>
chip_gen: v7x
topology: tpu7x:2x2x1
jax: 0.10.0
libtpu: 0.0.40
codegen_flags: <defaults>
</compile_context>

<pallas_src>
import jax
import jax.numpy as jnp
from jax import lax
from jax.experimental import pallas as pl
from jax.experimental.pallas import tpu as pltpu


# ----------------------------------------------------------------------------
# Recurrent kernel: attention + LSTM cell, UT timesteps per grid step.
# ----------------------------------------------------------------------------
def make_rnn_kernel(H, UT):
    def kernel(feat_ref, attvw_ref, emb_ref, h0_ref, c0_ref,
               w_hw_ref, b_hw_ref,
               w_xc_ref, w_xe_ref, w_hh_ref, b_ref,
               hout_ref,
               h_sc, c_sc):
        tc = pl.program_id(1)

        @pl.when(tc == 0)
        def _init():
            h_sc[...] = h0_ref[...]
            c_sc[...] = c0_ref[...]

        # Loop-invariant tile loads (hoisted out of the timestep loop).
        feats = feat_ref[...]        # (TB, N, D)
        att_vw = attvw_ref[...]      # (TB, N)   precomputed visual term
        w_hw = w_hw_ref[...]         # (1, H)    row vector
        b_hw = b_hw_ref[...]         # (1, 1)
        w_xc = w_xc_ref[...]         # (D, 4H)
        w_xe = w_xe_ref[...]         # (E, 4H)
        w_hh = w_hh_ref[...]         # (H, 4H)
        b_g = b_ref[...]             # (1, 4H)

        def step(u, carry):
            h = h_sc[...]            # (TB, H)
            c = c_sc[...]            # (TB, H)

            # --- attention (VPU/XLU only; MXU stays free for the gates) -----
            att_hw = jnp.sum(h * w_hw, axis=1, keepdims=True) + b_hw   # (TB, 1)
            logits = att_vw + att_hw                                   # (TB, N)
            logits = logits - jnp.max(logits, axis=1, keepdims=True)
            ex = jnp.exp(logits)
            alpha = ex / jnp.sum(ex, axis=1, keepdims=True)            # (TB, N)
            # context: broadcast-multiply + sublane reduce (no q=1 matmuls)
            ctx = jnp.sum(alpha[:, :, None] * feats, axis=1)           # (TB, D)

            emb = emb_ref[u]                                           # (TB, E)

            # --- LSTM cell; input = concat([ctx, emb]) as split matmuls -----
            # PyTorch gate order: i, f, g, o. Weights pre-transposed in wrapper.
            gates = (jnp.dot(ctx, w_xc, preferred_element_type=jnp.float32)
                     + jnp.dot(emb, w_xe, preferred_element_type=jnp.float32)
                     + jnp.dot(h, w_hh, preferred_element_type=jnp.float32)
                     + b_g)                                            # (TB, 4H)
            i_g = jax.nn.sigmoid(gates[:, 0 * H:1 * H])
            f_g = jax.nn.sigmoid(gates[:, 1 * H:2 * H])
            g_g = jnp.tanh(gates[:, 2 * H:3 * H])
            o_g = jax.nn.sigmoid(gates[:, 3 * H:4 * H])
            c_new = f_g * c + i_g * g_g
            h_new = o_g * jnp.tanh(c_new)
            h_sc[...] = h_new
            c_sc[...] = c_new
            hout_ref[u] = h_new        # time-major (UT, TB, H) block, row u
            return carry

        lax.fori_loop(0, UT, step, 0, unroll=True)

    return kernel


# ----------------------------------------------------------------------------
# Batched vocab projection + log_softmax over packed (time-major) rows.
# ----------------------------------------------------------------------------
def proj_kernel(h_ref, w_ref, b_ref, logsm_ref):
    words = jnp.dot(h_ref[...], w_ref[...],
                    preferred_element_type=jnp.float32) + b_ref[...]   # (TM, V)
    m = jnp.max(words, axis=1, keepdims=True)
    z = words - m
    s = jnp.sum(jnp.exp(z), axis=1, keepdims=True)
    logsm_ref[...] = z - jnp.log(s)


def _vmem_limit_bytes():
    """~80% of physical VMEM, capped at 112 MiB (leaves Mosaic headroom)."""
    try:
        cap = pltpu.get_tpu_info().vmem_capacity_bytes
    except Exception:
        cap = 128 * 1024 * 1024
    return min(int(cap * 0.8), 112 * 1024 * 1024)


def _pick_batch_tile(B):
    """Prefer >=2 batch tiles (megacore / v7x dual TC) with TB % 8 == 0."""
    for nb in (2, 4, 8):
        if B % nb == 0 and (B // nb) % 8 == 0:
            return B // nb
    return B


def decoder_forward(features, captions, params, *, batch_tile=None,
                    time_chunk=4, proj_row_tile=256):
    features = features.astype(jnp.float32)
    B, N, D = features.shape
    seq = captions.shape[1]
    E = params["embed"].shape[1]
    H = params["w_init_h"].shape[0]
    V = params["w_out"].shape[0]

    TB = _pick_batch_tile(B) if batch_tile is None else batch_tile
    assert B % TB == 0
    nb = B // TB

    UT = max(1, time_chunk)
    seq_pad = pl.cdiv(seq, UT) * UT
    n_chunks = seq_pad // UT

    vmem_limit = _vmem_limit_bytes()

    # ---- loop-invariant precompute (plain JAX glue) -------------------------
    emb = jnp.take(params["embed"], captions, axis=0).astype(jnp.float32)  # (B, seq, E)
    emb_tm = jnp.transpose(emb, (1, 0, 2))                                 # (seq, B, E)
    if seq_pad > seq:
        emb_tm = jnp.pad(emb_tm, ((0, seq_pad - seq), (0, 0), (0, 0)))     # pad tail

    # visual attention term (h-independent, hoisted out of the time loop)
    att_vw = (jnp.einsum('bnd,d->bn', features, params["w_vw"][0])
              + params["b_vw"][0]).astype(jnp.float32)                     # (B, N)

    # initial hidden / cell state (loop-invariant)
    fsum = jnp.sum(features, axis=1)                                       # (B, D)
    h0 = ((fsum @ params["w_init_h"].T) / N).astype(jnp.float32)
    c0 = ((fsum @ params["w_init_c"].T) / N).astype(jnp.float32)

    # pre-transposed / pre-split weights, pre-summed biases
    w_hw_row = params["w_hw"].reshape(1, H).astype(jnp.float32)  # (1, H) row vector
    b_hw = params["b_hw"].reshape(1, 1).astype(jnp.float32)
    w_ih_t = params["w_ih"].T.astype(jnp.float32)                # (D+E, 4H)
    w_xc = w_ih_t[:D, :]                                         # (D, 4H)
    w_xe = w_ih_t[D:, :]                                         # (E, 4H)
    w_hh_t = params["w_hh"].T.astype(jnp.float32)                # (H, 4H)
    b_g = (params["b_ih"] + params["b_hh"]).reshape(1, 4 * H).astype(jnp.float32)
    w_out_t = params["w_out"].T.astype(jnp.float32)              # (H, V)
    b_out = params["b_out"].reshape(1, V).astype(jnp.float32)

    single_buf = pl.Buffered(1)   # loop-invariant inputs: no double-buffering

    def const_spec(shape):
        zeros = (0,) * len(shape)
        return pl.BlockSpec(shape, lambda b, t, _z=zeros: _z,
                            pipeline_mode=single_buf)

    rnn_in_specs = [
        # per-batch-tile, time-invariant inputs: single-buffered
        pl.BlockSpec((TB, N, D), lambda b, t: (b, 0, 0), pipeline_mode=single_buf),
        pl.BlockSpec((TB, N), lambda b, t: (b, 0), pipeline_mode=single_buf),
        # embeddings streamed one time-chunk at a time (default double-buffer)
        pl.BlockSpec((UT, TB, E), lambda b, t: (t, b, 0)),
        pl.BlockSpec((TB, H), lambda b, t: (b, 0), pipeline_mode=single_buf),  # h0
        pl.BlockSpec((TB, H), lambda b, t: (b, 0), pipeline_mode=single_buf),  # c0
        const_spec((1, H)), const_spec((1, 1)),               # attn_hw row, bias
        const_spec((D, 4 * H)), const_spec((E, 4 * H)),       # lstm input weights
        const_spec((H, 4 * H)), const_spec((1, 4 * H)),       # lstm hidden w, bias
    ]
    rnn_out_spec = pl.BlockSpec((UT, TB, H), lambda b, t: (t, b, 0))  # time-major h

    h_all = pl.pallas_call(
        make_rnn_kernel(H, UT),
        out_shape=jax.ShapeDtypeStruct((seq_pad, B, H), jnp.float32),
        grid_spec=pltpu.PrefetchScalarGridSpec(
            num_scalar_prefetch=0,
            grid=(nb, n_chunks),
            in_specs=rnn_in_specs,
            out_specs=rnn_out_spec,
            scratch_shapes=[pltpu.VMEM((TB, H), jnp.float32),   # h state
                            pltpu.VMEM((TB, H), jnp.float32)],  # c state
        ),
        compiler_params=pltpu.CompilerParams(
            dimension_semantics=("parallel", "arbitrary"),
            vmem_limit_bytes=vmem_limit),
    )(features, att_vw, emb_tm, h0, c0,
      w_hw_row, b_hw, w_xc, w_xe, w_hh_t, b_g)

    # pack_padded_sequence(batch_first=True) with equal lengths == time-major
    # flatten; h_all is already time-major so the slice+reshape is cheap.
    SB = seq * B
    h_packed = h_all[:seq].reshape(SB, H)

    # fixed 256-row projection tiles; pad rows instead of searching divisors.
    TM = proj_row_tile
    SB_pad = pl.cdiv(SB, TM) * TM
    if SB_pad > SB:
        h_packed = jnp.pad(h_packed, ((0, SB_pad - SB), (0, 0)))

    logsm_pad = pl.pallas_call(
        proj_kernel,
        out_shape=jax.ShapeDtypeStruct((SB_pad, V), jnp.float32),
        grid_spec=pltpu.PrefetchScalarGridSpec(
            num_scalar_prefetch=0,
            grid=(SB_pad // TM,),
            in_specs=[pl.BlockSpec((TM, H), lambda i: (i, 0)),
                      pl.BlockSpec((H, V), lambda i: (0, 0),
                                   pipeline_mode=single_buf),
                      pl.BlockSpec((1, V), lambda i: (0, 0),
                                   pipeline_mode=single_buf)],
            out_specs=pl.BlockSpec((TM, V), lambda i: (i, 0)),
        ),
        compiler_params=pltpu.CompilerParams(
            dimension_semantics=("parallel",),
            vmem_limit_bytes=vmem_limit),
    )(h_packed, w_out_t, b_out)

    log_probs = logsm_pad[:SB]
    # softmax recovered exactly as exp(log_softmax): halves kernel writeback
    # and removes the approx-reciprocal error of the previous version.
    probs = jnp.exp(log_probs)
    return log_probs, probs


def reference_forward(features, captions, params):
    """Pure-JAX reference mirroring the PyTorch forward."""
    B, N, D = features.shape
    seq = captions.shape[1]
    emb_all = params["embed"][captions]
    fsum = jnp.sum(features, axis=1)
    h = fsum @ params["w_init_h"].T / N
    c = fsum @ params["w_init_c"].T / N
    words_all = []
    for i in range(seq):
        att_vw = features @ params["w_vw"].T + params["b_vw"]           # (B, N, 1)
        att_hw = (h @ params["w_hw"].T + params["b_hw"])[:, None, :]    # (B, 1, 1)
        alpha = jax.nn.softmax(att_vw + att_hw, axis=1)
        ctx = jnp.sum(features * alpha, axis=1)
        x = jnp.concatenate([ctx, emb_all[:, i, :]], axis=-1)
        gates = (x @ params["w_ih"].T + params["b_ih"]
                 + h @ params["w_hh"].T + params["b_hh"])
        i_g, f_g, g_g, o_g = jnp.split(gates, 4, axis=-1)
        c = jax.nn.sigmoid(f_g) * c + jax.nn.sigmoid(i_g) * jnp.tanh(g_g)
        h = jax.nn.sigmoid(o_g) * jnp.tanh(c)
        words_all.append(h @ params["w_out"].T + params["b_out"])
    ws = jnp.stack(words_all, axis=1)
    packed = jnp.transpose(ws, (1, 0, 2)).reshape(seq * B, -1)
    return jax.nn.log_softmax(packed, axis=1), jax.nn.softmax(packed, axis=1)


if __name__ == "__main__":
    # small, module-consistent shapes
    B, vis_num, vis_dim = 2, 8, 32
    embed_dim, hidden_dim, vocab_size = 16, 32, 64
    seq = 5

    key = jax.random.PRNGKey(0)
    ks = jax.random.split(key, 16)
    s = 0.1
    params = {
        "w_init_h": jax.random.normal(ks[0], (hidden_dim, vis_dim), jnp.float32) * s,
        "w_init_c": jax.random.normal(ks[1], (hidden_dim, vis_dim), jnp.float32) * s,
        "w_vw":     jax.random.normal(ks[2], (1, vis_dim), jnp.float32) * s,
        "b_vw":     jax.random.normal(ks[3], (1,), jnp.float32) * s,
        "w_hw":     jax.random.normal(ks[4], (1, hidden_dim), jnp.float32) * s,
        "b_hw":     jax.random.normal(ks[5], (1,), jnp.float32) * s,
        "embed":    jax.random.normal(ks[6], (vocab_size, embed_dim), jnp.float32) * s,
        "w_ih":     jax.random.normal(ks[7], (4 * hidden_dim, vis_dim + embed_dim), jnp.float32) * s,
        "w_hh":     jax.random.normal(ks[8], (4 * hidden_dim, hidden_dim), jnp.float32) * s,
        "b_ih":     jax.random.normal(ks[9], (4 * hidden_dim,), jnp.float32) * s,
        "b_hh":     jax.random.normal(ks[10], (4 * hidden_dim,), jnp.float32) * s,
        "w_out":    jax.random.normal(ks[11], (vocab_size, hidden_dim), jnp.float32) * s,
        "b_out":    jax.random.normal(ks[12], (vocab_size,), jnp.float32) * s,
    }

    features = jax.random.normal(ks[13], (B, vis_num, vis_dim), jnp.float32) * 0.5
    captions = jax.random.randint(ks[14], (B, seq), 0, vocab_size, dtype=jnp.int32)

    log_probs, probs = decoder_forward(features, captions, params)
    jax.block_until_ready((log_probs, probs))

    ref_log, ref_probs = reference_forward(features, captions, params)
    assert log_probs.shape == (seq * B, vocab_size)
    assert probs.shape == (seq * B, vocab_size)
    assert jnp.allclose(log_probs, ref_log, atol=1e-3, rtol=1e-3)
    assert jnp.allclose(probs, ref_probs, atol=1e-3, rtol=1e-3)

    print("KERNEL_OK")
</pallas_src>

<mosaic_0001>
module attributes {stable_mosaic.version = 11 : i64} {
  func.func @kernel(%arg0: i32, %arg1: i32, %arg2: memref<2x8x32xf32, #tpu.memory_space<vmem>>, %arg3: memref<2x8xf32, #tpu.memory_space<vmem>>, %arg4: memref<4x2x16xf32, #tpu.memory_space<vmem>>, %arg5: memref<2x32xf32, #tpu.memory_space<vmem>>, %arg6: memref<2x32xf32, #tpu.memory_space<vmem>>, %arg7: memref<1x32xf32, #tpu.memory_space<vmem>>, %arg8: memref<1x1xf32, #tpu.memory_space<vmem>>, %arg9: memref<32x128xf32, #tpu.memory_space<vmem>>, %arg10: memref<16x128xf32, #tpu.memory_space<vmem>>, %arg11: memref<32x128xf32, #tpu.memory_space<vmem>>, %arg12: memref<1x128xf32, #tpu.memory_space<vmem>>, %arg13: memref<4x2x32xf32, #tpu.memory_space<vmem>>, %arg14: memref<2x32xf32, #tpu.memory_space<vmem>>, %arg15: memref<2x32xf32, #tpu.memory_space<vmem>>) attributes {dimension_semantics = [#tpu.dimension_semantics<parallel>, #tpu.dimension_semantics<arbitrary>], iteration_bounds = array<i64: 1, 2>, scalar_prefetch = 0 : i64, scratch_operands = 2 : i64, tpu.core_type = #tpu.core_type<tc>, window_params = [{pipeline_mode = #tpu.pipeline_mode<synchronous>, transform_indices = @transform_0, window_bounds = array<i64: 2, 8, 32>}, {pipeline_mode = #tpu.pipeline_mode<synchronous>, transform_indices = @transform_1, window_bounds = array<i64: 2, 8>}, {transform_indices = @transform_2, window_bounds = array<i64: 4, 2, 16>}, {pipeline_mode = #tpu.pipeline_mode<synchronous>, transform_indices = @transform_3, window_bounds = array<i64: 2, 32>}, {pipeline_mode = #tpu.pipeline_mode<synchronous>, transform_indices = @transform_4, window_bounds = array<i64: 2, 32>}, {pipeline_mode = #tpu.pipeline_mode<synchronous>, transform_indices = @transform_5, window_bounds = array<i64: 1, 32>}, {pipeline_mode = #tpu.pipeline_mode<synchronous>, transform_indices = @transform_6, window_bounds = array<i64: 1, 1>}, {pipeline_mode = #tpu.pipeline_mode<synchronous>, transform_indices = @transform_7, window_bounds = array<i64: 32, 128>}, {pipeline_mode = #tpu.pipeline_mode<synchronous>, transform_indices = @transform_8, window_bounds = array<i64: 16, 128>}, {pipeline_mode = #tpu.pipeline_mode<synchronous>, transform_indices = @transform_9, window_bounds = array<i64: 32, 128>}, {pipeline_mode = #tpu.pipeline_mode<synchronous>, transform_indices = @transform_10, window_bounds = array<i64: 1, 128>}, {transform_indices = @transform_11, window_bounds = array<i64: 4, 2, 32>}]} {
    %c0_i32 = arith.constant 0 : i32
    %0 = arith.cmpi eq, %arg1, %c0_i32 : i32
    %1 = arith.extui %0 : i1 to i32
    %c0_i32_0 = arith.constant 0 : i32
    %2 = arith.cmpi ne, %1, %c0_i32_0 : i32
    scf.if %2 {
      %c0_105 = arith.constant 0 : index
      %c0_106 = arith.constant 0 : index
      %267 = vector.load %arg5[%c0_105, %c0_106] : memref<2x32xf32, #tpu.memory_space<vmem>>, vector<2x32xf32>
      %c0_107 = arith.constant 0 : index
      %c0_108 = arith.constant 0 : index
      %268 = vector.load %arg14[%c0_107, %c0_108] : memref<2x32xf32, #tpu.memory_space<vmem>>, vector<2x32xf32>
      tpu.vector_store %arg14[%c0_107, %c0_108], %267 {strides = array<i32>} : memref<2x32xf32, #tpu.memory_space<vmem>>, vector<2x32xf32>,
      %c0_109 = arith.constant 0 : index
      %c0_110 = arith.constant 0 : index
      %269 = vector.load %arg6[%c0_109, %c0_110] : memref<2x32xf32, #tpu.memory_space<vmem>>, vector<2x32xf32>
      %c0_111 = arith.constant 0 : index
      %c0_112 = arith.constant 0 : index
      %270 = vector.load %arg15[%c0_111, %c0_112] : memref<2x32xf32, #tpu.memory_space<vmem>>, vector<2x32xf32>
      tpu.vector_store %arg15[%c0_111, %c0_112], %269 {strides = array<i32>} : memref<2x32xf32, #tpu.memory_space<vmem>>, vector<2x32xf32>,
    } else {
    }
    %c0 = arith.constant 0 : index
    %c0_1 = arith.constant 0 : index
    %c0_2 = arith.constant 0 : index
    %3 = vector.load %arg2[%c0, %c0_1, %c0_2] : memref<2x8x32xf32, #tpu.memory_space<vmem>>, vector<2x8x32xf32>
    %c0_3 = arith.constant 0 : index
    %c0_4 = arith.constant 0 : index
    %4 = vector.load %arg3[%c0_3, %c0_4] : memref<2x8xf32, #tpu.memory_space<vmem>>, vector<2x8xf32>
    %c0_5 = arith.constant 0 : index
    %c0_6 = arith.constant 0 : index
    %5 = vector.load %arg7[%c0_5, %c0_6] : memref<1x32xf32, #tpu.memory_space<vmem>>, vector<1x32xf32>
    %c0_7 = arith.constant 0 : index
    %c0_8 = arith.constant 0 : index
    %6 = vector.load %arg8[%c0_7, %c0_8] : memref<1x1xf32, #tpu.memory_space<vmem>>, vector<1x1xf32>
    %c0_9 = arith.constant 0 : index
    %c0_10 = arith.constant 0 : index
    %7 = vector.load %arg9[%c0_9, %c0_10] : memref<32x128xf32, #tpu.memory_space<vmem>>, vector<32x128xf32>
    %c0_11 = arith.constant 0 : index
    %c0_12 = arith.constant 0 : index
    %8 = vector.load %arg10[%c0_11, %c0_12] : memref<16x128xf32, #tpu.memory_space<vmem>>, vector<16x128xf32>
    %c0_13 = arith.constant 0 : index
    %c0_14 = arith.constant 0 : index
    %9 = vector.load %arg11[%c0_13, %c0_14] : memref<32x128xf32, #tpu.memory_space<vmem>>, vector<32x128xf32>
    %c0_15 = arith.constant 0 : index
    %c0_16 = arith.constant 0 : index
    %10 = vector.load %arg12[%c0_15, %c0_16] : memref<1x128xf32, #tpu.memory_space<vmem>>, vector<1x128xf32>
    %c0_i32_17 = arith.constant 0 : i32
    %c0_18 = arith.constant 0 : index
    %c0_19 = arith.constant 0 : index
    %11 = vector.load %arg14[%c0_18, %c0_19] : memref<2x32xf32, #tpu.memory_space<vmem>>, vector<2x32xf32>
    %c0_20 = arith.constant 0 : index
    %c0_21 = arith.constant 0 : index
    %12 = vector.load %arg15[%c0_20, %c0_21] : memref<2x32xf32, #tpu.memory_space<vmem>>, vector<2x32xf32>
    %13 = vector.broadcast %5 : vector<1x32xf32> to vector<2x32xf32>
    %14 = arith.mulf %11, %13 : vector<2x32xf32>
    %cst = arith.constant dense<0.000000e+00> : vector<2xf32>
    %15 = vector.multi_reduction <add>, %14, %cst [1] : vector<2x32xf32> to vector<2xf32>
    %16 = vector.shape_cast %15 : vector<2xf32> to vector<2x1xf32>
    %17 = vector.broadcast %6 : vector<1x1xf32> to vector<2x1xf32>
    %18 = arith.addf %16, %17 : vector<2x1xf32>
    %19 = vector.broadcast %18 : vector<2x1xf32> to vector<2x8xf32>
    %20 = arith.addf %4, %19 : vector<2x8xf32>
    %cst_22 = arith.constant dense<0xFF800000> : vector<2xf32>
    %21 = vector.multi_reduction <maximumf>, %20, %cst_22 [1] : vector<2x8xf32> to vector<2xf32>
    %22 = vector.shape_cast %21 : vector<2xf32> to vector<2x1xf32>
    %23 = vector.broadcast %22 : vector<2x1xf32> to vector<2x8xf32>
    %24 = arith.subf %20, %23 : vector<2x8xf32>
    %25 = math.exp %24 : vector<2x8xf32>
    %cst_23 = arith.constant dense<0.000000e+00> : vector<2xf32>
    %26 = vector.multi_reduction <add>, %25, %cst_23 [1] : vector<2x8xf32> to vector<2xf32>
    %27 = vector.shape_cast %26 : vector<2xf32> to vector<2x1xf32>
    %28 = vector.broadcast %27 : vector<2x1xf32> to vector<2x8xf32>
    %29 = arith.divf %25, %28 : vector<2x8xf32>
    %30 = vector.shape_cast %29 : vector<2x8xf32> to vector<2x8x1xf32>
    %31 = vector.broadcast %30 : vector<2x8x1xf32> to vector<2x8x32xf32>
    %32 = arith.mulf %31, %3 : vector<2x8x32xf32>
    %cst_24 = arith.constant dense<0.000000e+00> : vector<2x32xf32>
    %33 = vector.multi_reduction <add>, %32, %cst_24 [1] : vector<2x8x32xf32> to vector<2x32xf32>
    %34 = arith.index_cast %c0_i32_17 : i32 to index
    %c0_25 = arith.constant 0 : index
    %c0_26 = arith.constant 0 : index
    %35 = vector.load %arg4[%34, %c0_25, %c0_26] : memref<4x2x16xf32, #tpu.memory_space<vmem>>, vector<1x2x16xf32>
    %36 = vector.shape_cast %35 : vector<1x2x16xf32> to vector<2x16xf32>
    %cst_27 = arith.constant dense<0.000000e+00> : vector<2x128xf32>
    %37 = tpu.matmul %33, %7, %cst_27 {dimension_numbers = #tpu.dot_dimension_numbers<[1], [0], [0], [1], [0, 0, 1, 1], [], []>} : vector<2x32xf32>, vector<32x128xf32>, vector<2x128xf32> -> vector<2x128xf32>
    %cst_28 = arith.constant dense<0.000000e+00> : vector<2x128xf32>
    %38 = tpu.matmul %36, %8, %cst_28 {dimension_numbers = #tpu.dot_dimension_numbers<[1], [0], [0], [1], [0, 0, 1, 1], [], []>} : vector<2x16xf32>, vector<16x128xf32>, vector<2x128xf32> -> vector<2x128xf32>
    %39 = arith.addf %37, %38 : vector<2x128xf32>
    %cst_29 = arith.constant dense<0.000000e+00> : vector<2x128xf32>
    %40 = tpu.matmul %11, %9, %cst_29 {dimension_numbers = #tpu.dot_dimension_numbers<[1], [0], [0], [1], [0, 0, 1, 1], [], []>} : vector<2x32xf32>, vector<32x128xf32>, vector<2x128xf32> -> vector<2x128xf32>
    %41 = arith.addf %39, %40 : vector<2x128xf32>
    %42 = vector.broadcast %10 : vector<1x128xf32> to vector<2x128xf32>
    %43 = arith.addf %41, %42 : vector<2x128xf32>
    %44 = vector.extract_strided_slice %43 {offsets = [0, 0], sizes = [2, 32], strides = [1, 1]} : vector<2x128xf32> to vector<2x32xf32>
    %45 = arith.negf %44 : vector<2x32xf32>
    %46 = math.exp %45 : vector<2x32xf32>
    %cst_30 = arith.constant 1.000000e+00 : f32
    %47 = vector.broadcast %cst_30 : f32 to vector<2x32xf32>
    %48 = arith.addf %47, %46 : vector<2x32xf32>
    %49 = arith.divf %47, %48 : vector<2x32xf32>
    %50 = vector.extract_strided_slice %43 {offsets = [0, 32], sizes = [2, 32], strides = [1, 1]} : vector<2x128xf32> to vector<2x32xf32>
    %51 = arith.negf %50 : vector<2x32xf32>
    %52 = math.exp %51 : vector<2x32xf32>
    %cst_31 = arith.constant 1.000000e+00 : f32
    %53 = vector.broadcast %cst_31 : f32 to vector<2x32xf32>
    %54 = arith.addf %53, %52 : vector<2x32xf32>
    %55 = arith.divf %53, %54 : vector<2x32xf32>
    %56 = vector.extract_strided_slice %43 {offsets = [0, 64], sizes = [2, 32], strides = [1, 1]} : vector<2x128xf32> to vector<2x32xf32>
    %57 = math.tanh %56 : vector<2x32xf32>
    %58 = vector.extract_strided_slice %43 {offsets = [0, 96], sizes = [2, 32], strides = [1, 1]} : vector<2x128xf32> to vector<2x32xf32>
    %59 = arith.negf %58 : vector<2x32xf32>
    %60 = math.exp %59 : vector<2x32xf32>
    %cst_32 = arith.constant 1.000000e+00 : f32
    %61 = vector.broadcast %cst_32 : f32 to vector<2x32xf32>
    %62 = arith.addf %61, %60 : vector<2x32xf32>
    %63 = arith.divf %61, %62 : vector<2x32xf32>
    %64 = arith.mulf %55, %12 : vector<2x32xf32>
    %65 = arith.mulf %49, %57 : vector<2x32xf32>
    %66 = arith.addf %64, %65 : vector<2x32xf32>
    %67 = math.tanh %66 : vector<2x32xf32>
    %68 = arith.mulf %63, %67 : vector<2x32xf32>
    %c0_33 = arith.constant 0 : index
    %c0_34 = arith.constant 0 : index
    %69 = vector.load %arg14[%c0_33, %c0_34] : memref<2x32xf32, #tpu.memory_space<vmem>>, vector<2x32xf32>
    tpu.vector_store %arg14[%c0_33, %c0_34], %68 {strides = array<i32>} : memref<2x32xf32, #tpu.memory_space<vmem>>, vector<2x32xf32>,
    %c0_35 = arith.constant 0 : index
    %c0_36 = arith.constant 0 : index
    %70 = vector.load %arg15[%c0_35, %c0_36] : memref<2x32xf32, #tpu.memory_space<vmem>>, vector<2x32xf32>
    tpu.vector_store %arg15[%c0_35, %c0_36], %66 {strides = array<i32>} : memref<2x32xf32, #tpu.memory_space<vmem>>, vector<2x32xf32>,
    %71 = arith.index_cast %c0_i32_17 : i32 to index
    %c0_37 = arith.constant 0 : index
    %c0_38 = arith.constant 0 : index
    %72 = vector.load %arg13[%71, %c0_37, %c0_38] : memref<4x2x32xf32, #tpu.memory_space<vmem>>, vector<1x2x32xf32>
    %73 = vector.shape_cast %72 : vector<1x2x32xf32> to vector<2x32xf32>
    %74 = vector.shape_cast %68 : vector<2x32xf32> to vector<1x2x32xf32>
    tpu.vector_store %arg13[%71, %c0_37, %c0_38], %74 {strides = array<i32>} : memref<4x2x32xf32, #tpu.memory_space<vmem>>, vector<1x2x32xf32>,
    %c1_i32 = arith.constant 1 : i32
    %c0_39 = arith.constant 0 : index
    %c0_40 = arith.constant 0 : index
    %75 = vector.load %arg14[%c0_39, %c0_40] : memref<2x32xf32, #tpu.memory_space<vmem>>, vector<2x32xf32>
    %c0_41 = arith.constant 0 : index
    %c0_42 = arith.constant 0 : index
    %76 = vector.load %arg15[%c0_41, %c0_42] : memref<2x32xf32, #tpu.memory_space<vmem>>, vector<2x32xf32>
    %77 = vector.broadcast %5 : vector<1x32xf32> to vector<2x32xf32>
    %78 = arith.mulf %75, %77 : vector<2x32xf32>
    %cst_43 = arith.constant dense<0.000000e+00> : vector<2xf32>
    %79 = vector.multi_reduction <add>, %78, %cst_43 [1] : vector<2x32xf32> to vector<2xf32>
    %80 = vector.shape_cast %79 : vector<2xf32> to vector<2x1xf32>
    %81 = vector.broadcast %6 : vector<1x1xf32> to vector<2x1xf32>
    %82 = arith.addf %80, %81 : vector<2x1xf32>
    %83 = vector.broadcast %82 : vector<2x1xf32> to vector<2x8xf32>
    %84 = arith.addf %4, %83 : vector<2x8xf32>
    %cst_44 = arith.constant dense<0xFF800000> : vector<2xf32>
    %85 = vector.multi_reduction <maximumf>, %84, %cst_44 [1] : vector<2x8xf32> to vector<2xf32>
    %86 = vector.shape_cast %85 : vector<2xf32> to vector<2x1xf32>
    %87 = vector.broadcast %86 : vector<2x1xf32> to vector<2x8xf32>
    %88 = arith.subf %84, %87 : vector<2x8xf32>
    %89 = math.exp %88 : vector<2x8xf32>
    %cst_45 = arith.constant dense<0.000000e+00> : vector<2xf32>
    %90 = vector.multi_reduction <add>, %89, %cst_45 [1] : vector<2x8xf32> to vector<2xf32>
    %91 = vector.shape_cast %90 : vector<2xf32> to vector<2x1xf32>
    %92 = vector.broadcast %91 : vector<2x1xf32> to vector<2x8xf32>
    %93 = arith.divf %89, %92 : vector<2x8xf32>
    %94 = vector.shape_cast %93 : vector<2x8xf32> to vector<2x8x1xf32>
    %95 = vector.broadcast %94 : vector<2x8x1xf32> to vector<2x8x32xf32>
    %96 = arith.mulf %95, %3 : vector<2x8x32xf32>
    %cst_46 = arith.constant dense<0.000000e+00> : vector<2x32xf32>
    %97 = vector.multi_reduction <add>, %96, %cst_46 [1] : vector<2x8x32xf32> to vector<2x32xf32>
    %98 = arith.index_cast %c1_i32 : i32 to index
    %c0_47 = arith.constant 0 : index
    %c0_48 = arith.constant 0 : index
    %99 = vector.load %arg4[%98, %c0_47, %c0_48] : memref<4x2x16xf32, #tpu.memory_space<vmem>>, vector<1x2x16xf32>
    %100 = vector.shape_cast %99 : vector<1x2x16xf32> to vector<2x16xf32>
    %cst_49 = arith.constant dense<0.000000e+00> : vector<2x128xf32>
    %101 = tpu.matmul %97, %7, %cst_49 {dimension_numbers = #tpu.dot_dimension_numbers<[1], [0], [0], [1], [0, 0, 1, 1], [], []>} : vector<2x32xf32>, vector<32x128xf32>, vector<2x128xf32> -> vector<2x128xf32>
    %cst_50 = arith.constant dense<0.000000e+00> : vector<2x128xf32>
    %102 = tpu.matmul %100, %8, %cst_50 {dimension_numbers = #tpu.dot_dimension_numbers<[1], [0], [0], [1], [0, 0, 1, 1], [], []>} : vector<2x16xf32>, vector<16x128xf32>, vector<2x128xf32> -> vector<2x128xf32>
    %103 = arith.addf %101, %102 : vector<2x128xf32>
    %cst_51 = arith.constant dense<0.000000e+00> : vector<2x128xf32>
    %104 = tpu.matmul %75, %9, %cst_51 {dimension_numbers = #tpu.dot_dimension_numbers<[1], [0], [0], [1], [0, 0, 1, 1], [], []>} : vector<2x32xf32>, vector<32x128xf32>, vector<2x128xf32> -> vector<2x128xf32>
    %105 = arith.addf %103, %104 : vector<2x128xf32>
    %106 = vector.broadcast %10 : vector<1x128xf32> to vector<2x128xf32>
    %107 = arith.addf %105, %106 : vector<2x128xf32>
    %108 = vector.extract_strided_slice %107 {offsets = [0, 0], sizes = [2, 32], strides = [1, 1]} : vector<2x128xf32> to vector<2x32xf32>
    %109 = arith.negf %108 : vector<2x32xf32>
    %110 = math.exp %109 : vector<2x32xf32>
    %cst_52 = arith.constant 1.000000e+00 : f32
    %111 = vector.broadcast %cst_52 : f32 to vector<2x32xf32>
    %112 = arith.addf %111, %110 : vector<2x32xf32>
    %113 = arith.divf %111, %112 : vector<2x32xf32>
    %114 = vector.extract_strided_slice %107 {offsets = [0, 32], sizes = [2, 32], strides = [1, 1]} : vector<2x128xf32> to vector<2x32xf32>
    %115 = arith.negf %114 : vector<2x32xf32>
    %116 = math.exp %115 : vector<2x32xf32>
    %cst_53 = arith.constant 1.000000e+00 : f32
    %117 = vector.broadcast %cst_53 : f32 to vector<2x32xf32>
    %118 = arith.addf %117, %116 : vector<2x32xf32>
    %119 = arith.divf %117, %118 : vector<2x32xf32>
    %120 = vector.extract_strided_slice %107 {offsets = [0, 64], sizes = [2, 32], strides = [1, 1]} : vector<2x128xf32> to vector<2x32xf32>
    %121 = math.tanh %120 : vector<2x32xf32>
    %122 = vector.extract_strided_slice %107 {offsets = [0, 96], sizes = [2, 32], strides = [1, 1]} : vector<2x128xf32> to vector<2x32xf32>
    %123 = arith.negf %122 : vector<2x32xf32>
    %124 = math.exp %123 : vector<2x32xf32>
    %cst_54 = arith.constant 1.000000e+00 : f32
    %125 = vector.broadcast %cst_54 : f32 to vector<2x32xf32>
    %126 = arith.addf %125, %124 : vector<2x32xf32>
    %127 = arith.divf %125, %126 : vector<2x32xf32>
    %128 = arith.mulf %119, %76 : vector<2x32xf32>
    %129 = arith.mulf %113, %121 : vector<2x32xf32>
    %130 = arith.addf %128, %129 : vector<2x32xf32>
    %131 = math.tanh %130 : vector<2x32xf32>
    %132 = arith.mulf %127, %131 : vector<2x32xf32>
    %c0_55 = arith.constant 0 : index
    %c0_56 = arith.constant 0 : index
    %133 = vector.load %arg14[%c0_55, %c0_56] : memref<2x32xf32, #tpu.memory_space<vmem>>, vector<2x32xf32>
    tpu.vector_store %arg14[%c0_55, %c0_56], %132 {strides = array<i32>} : memref<2x32xf32, #tpu.memory_space<vmem>>, vector<2x32xf32>,
    %c0_57 = arith.constant 0 : index
    %c0_58 = arith.constant 0 : index
    %134 = vector.load %arg15[%c0_57, %c0_58] : memref<2x32xf32, #tpu.memory_space<vmem>>, vector<2x32xf32>
    tpu.vector_store %arg15[%c0_57, %c0_58], %130 {strides = array<i32>} : memref<2x32xf32, #tpu.memory_space<vmem>>, vector<2x32xf32>,
    %135 = arith.index_cast %c1_i32 : i32 to index
    %c0_59 = arith.constant 0 : index
    %c0_60 = arith.constant 0 : index
    %136 = vector.load %arg13[%135, %c0_59, %c0_60] : memref<4x2x32xf32, #tpu.memory_space<vmem>>, vector<1x2x32xf32>
    %137 = vector.shape_cast %136 : vector<1x2x32xf32> to vector<2x32xf32>
    %138 = vector.shape_cast %132 : vector<2x32xf32> to vector<1x2x32xf32>
    tpu.vector_store %arg13[%135, %c0_59, %c0_60], %138 {strides = array<i32>} : memref<4x2x32xf32, #tpu.memory_space<vmem>>, vector<1x2x32xf32>,
    %c2_i32 = arith.constant 2 : i32
    %c0_61 = arith.constant 0 : index
    %c0_62 = arith.constant 0 : index
    %139 = vector.load %arg14[%c0_61, %c0_62] : memref<2x32xf32, #tpu.memory_space<vmem>>, vector<2x32xf32>
    %c0_63 = arith.constant 0 : index
    %c0_64 = arith.constant 0 : index
    %140 = vector.load %arg15[%c0_63, %c0_64] : memref<2x32xf32, #tpu.memory_space<vmem>>, vector<2x32xf32>
    %141 = vector.broadcast %5 : vector<1x32xf32> to vector<2x32xf32>
    %142 = arith.mulf %139, %141 : vector<2x32xf32>
    %cst_65 = arith.constant dense<0.000000e+00> : vector<2xf32>
    %143 = vector.multi_reduction <add>, %142, %cst_65 [1] : vector<2x32xf32> to vector<2xf32>
    %144 = vector.shape_cast %143 : vector<2xf32> to vector<2x1xf32>
    %145 = vector.broadcast %6 : vector<1x1xf32> to vector<2x1xf32>
    %146 = arith.addf %144, %145 : vector<2x1xf32>
    %147 = vector.broadcast %146 : vector<2x1xf32> to vector<2x8xf32>
    %148 = arith.addf %4, %147 : vector<2x8xf32>
    %cst_66 = arith.constant dense<0xFF800000> : vector<2xf32>
    %149 = vector.multi_reduction <maximumf>, %148, %cst_66 [1] : vector<2x8xf32> to vector<2xf32>
    %150 = vector.shape_cast %149 : vector<2xf32> to vector<2x1xf32>
    %151 = vector.broadcast %150 : vector<2x1xf32> to vector<2x8xf32>
    %152 = arith.subf %148, %151 : vector<2x8xf32>
    %153 = math.exp %152 : vector<2x8xf32>
    %cst_67 = arith.constant dense<0.000000e+00> : vector<2xf32>
    %154 = vector.multi_reduction <add>, %153, %cst_67 [1] : vector<2x8xf32> to vector<2xf32>
    %155 = vector.shape_cast %154 : vector<2xf32> to vector<2x1xf32>
    %156 = vector.broadcast %155 : vector<2x1xf32> to vector<2x8xf32>
    %157 = arith.divf %153, %156 : vector<2x8xf32>
    %158 = vector.shape_cast %157 : vector<2x8xf32> to vector<2x8x1xf32>
    %159 = vector.broadcast %158 : vector<2x8x1xf32> to vector<2x8x32xf32>
    %160 = arith.mulf %159, %3 : vector<2x8x32xf32>
    %cst_68 = arith.constant dense<0.000000e+00> : vector<2x32xf32>
    %161 = vector.multi_reduction <add>, %160, %cst_68 [1] : vector<2x8x32xf32> to vector<2x32xf32>
    %162 = arith.index_cast %c2_i32 : i32 to index
    %c0_69 = arith.constant 0 : index
    %c0_70 = arith.constant 0 : index
    %163 = vector.load %arg4[%162, %c0_69, %c0_70] : memref<4x2x16xf32, #tpu.memory_space<vmem>>, vector<1x2x16xf32>
    %164 = vector.shape_cast %163 : vector<1x2x16xf32> to vector<2x16xf32>
    %cst_71 = arith.constant dense<0.000000e+00> : vector<2x128xf32>
    %165 = tpu.matmul %161, %7, %cst_71 {dimension_numbers = #tpu.dot_dimension_numbers<[1], [0], [0], [1], [0, 0, 1, 1], [], []>} : vector<2x32xf32>, vector<32x128xf32>, vector<2x128xf32> -> vector<2x128xf32>
    %cst_72 = arith.constant dense<0.000000e+00> : vector<2x128xf32>
    %166 = tpu.matmul %164, %8, %cst_72 {dimension_numbers = #tpu.dot_dimension_numbers<[1], [0], [0], [1], [0, 0, 1, 1], [], []>} : vector<2x16xf32>, vector<16x128xf32>, vector<2x128xf32> -> vector<2x128xf32>
    %167 = arith.addf %165, %166 : vector<2x128xf32>
    %cst_73 = arith.constant dense<0.000000e+00> : vector<2x128xf32>
    %168 = tpu.matmul %139, %9, %cst_73 {dimension_numbers = #tpu.dot_dimension_numbers<[1], [0], [0], [1], [0, 0, 1, 1], [], []>} : vector<2x32xf32>, vector<32x128xf32>, vector<2x128xf32> -> vector<2x128xf32>
    %169 = arith.addf %167, %168 : vector<2x128xf32>
    %170 = vector.broadcast %10 : vector<1x128xf32> to vector<2x128xf32>
    %171 = arith.addf %169, %170 : vector<2x128xf32>
    %172 = vector.extract_strided_slice %171 {offsets = [0, 0], sizes = [2, 32], strides = [1, 1]} : vector<2x128xf32> to vector<2x32xf32>
    %173 = arith.negf %172 : vector<2x32xf32>
    %174 = math.exp %173 : vector<2x32xf32>
    %cst_74 = arith.constant 1.000000e+00 : f32
    %175 = vector.broadcast %cst_74 : f32 to vector<2x32xf32>
    %176 = arith.addf %175, %174 : vector<2x32xf32>
    %177 = arith.divf %175, %176 : vector<2x32xf32>
    %178 = vector.extract_strided_slice %171 {offsets = [0, 32], sizes = [2, 32], strides = [1, 1]} : vector<2x128xf32> to vector<2x32xf32>
    %179 = arith.negf %178 : vector<2x32xf32>
    %180 = math.exp %179 : vector<2x32xf32>
    %cst_75 = arith.constant 1.000000e+00 : f32
    %181 = vector.broadcast %cst_75 : f32 to vector<2x32xf32>
    %182 = arith.addf %181, %180 : vector<2x32xf32>
    %183 = arith.divf %181, %182 : vector<2x32xf32>
    %184 = vector.extract_strided_slice %171 {offsets = [0, 64], sizes = [2, 32], strides = [1, 1]} : vector<2x128xf32> to vector<2x32xf32>
    %185 = math.tanh %184 : vector<2x32xf32>
    %186 = vector.extract_strided_slice %171 {offsets = [0, 96], sizes = [2, 32], strides = [1, 1]} : vector<2x128xf32> to vector<2x32xf32>
    %187 = arith.negf %186 : vector<2x32xf32>
    %188 = math.exp %187 : vector<2x32xf32>
    %cst_76 = arith.constant 1.000000e+00 : f32
    %189 = vector.broadcast %cst_76 : f32 to vector<2x32xf32>
    %190 = arith.addf %189, %188 : vector<2x32xf32>
    %191 = arith.divf %189, %190 : vector<2x32xf32>
    %192 = arith.mulf %183, %140 : vector<2x32xf32>
    %193 = arith.mulf %177, %185 : vector<2x32xf32>
    %194 = arith.addf %192, %193 : vector<2x32xf32>
    %195 = math.tanh %194 : vector<2x32xf32>
    %196 = arith.mulf %191, %195 : vector<2x32xf32>
    %c0_77 = arith.constant 0 : index
    %c0_78 = arith.constant 0 : index
    %197 = vector.load %arg14[%c0_77, %c0_78] : memref<2x32xf32, #tpu.memory_space<vmem>>, vector<2x32xf32>
    tpu.vector_store %arg14[%c0_77, %c0_78], %196 {strides = array<i32>} : memref<2x32xf32, #tpu.memory_space<vmem>>, vector<2x32xf32>,
    %c0_79 = arith.constant 0 : index
    %c0_80 = arith.constant 0 : index
    %198 = vector.load %arg15[%c0_79, %c0_80] : memref<2x32xf32, #tpu.memory_space<vmem>>, vector<2x32xf32>
    tpu.vector_store %arg15[%c0_79, %c0_80], %194 {strides = array<i32>} : memref<2x32xf32, #tpu.memory_space<vmem>>, vector<2x32xf32>,
    %199 = arith.index_cast %c2_i32 : i32 to index
    %c0_81 = arith.constant 0 : index
    %c0_82 = arith.constant 0 : index
    %200 = vector.load %arg13[%199, %c0_81, %c0_82] : memref<4x2x32xf32, #tpu.memory_space<vmem>>, vector<1x2x32xf32>
    %201 = vector.shape_cast %200 : vector<1x2x32xf32> to vector<2x32xf32>
    %202 = vector.shape_cast %196 : vector<2x32xf32> to vector<1x2x32xf32>
    tpu.vector_store %arg13[%199, %c0_81, %c0_82], %202 {strides = array<i32>} : memref<4x2x32xf32, #tpu.memory_space<vmem>>, vector<1x2x32xf32>,
    %c3_i32 = arith.constant 3 : i32
    %c0_83 = arith.constant 0 : index
    %c0_84 = arith.constant 0 : index
    %203 = vector.load %arg14[%c0_83, %c0_84] : memref<2x32xf32, #tpu.memory_space<vmem>>, vector<2x32xf32>
    %c0_85 = arith.constant 0 : index
    %c0_86 = arith.constant 0 : index
    %204 = vector.load %arg15[%c0_85, %c0_86] : memref<2x32xf32, #tpu.memory_space<vmem>>, vector<2x32xf32>
    %205 = vector.broadcast %5 : vector<1x32xf32> to vector<2x32xf32>
    %206 = arith.mulf %203, %205 : vector<2x32xf32>
    %cst_87 = arith.constant dense<0.000000e+00> : vector<2xf32>
    %207 = vector.multi_reduction <add>, %206, %cst_87 [1] : vector<2x32xf32> to vector<2xf32>
    %208 = vector.shape_cast %207 : vector<2xf32> to vector<2x1xf32>
    %209 = vector.broadcast %6 : vector<1x1xf32> to vector<2x1xf32>
    %210 = arith.addf %208, %209 : vector<2x1xf32>
    %211 = vector.broadcast %210 : vector<2x1xf32> to vector<2x8xf32>
    %212 = arith.addf %4, %211 : vector<2x8xf32>
    %cst_88 = arith.constant dense<0xFF800000> : vector<2xf32>
    %213 = vector.multi_reduction <maximumf>, %212, %cst_88 [1] : vector<2x8xf32> to vector<2xf32>
    %214 = vector.shape_cast %213 : vector<2xf32> to vector<2x1xf32>
    %215 = vector.broadcast %214 : vector<2x1xf32> to vector<2x8xf32>
    %216 = arith.subf %212, %215 : vector<2x8xf32>
    %217 = math.exp %216 : vector<2x8xf32>
    %cst_89 = arith.constant dense<0.000000e+00> : vector<2xf32>
    %218 = vector.multi_reduction <add>, %217, %cst_89 [1] : vector<2x8xf32> to vector<2xf32>
    %219 = vector.shape_cast %218 : vector<2xf32> to vector<2x1xf32>
    %220 = vector.broadcast %219 : vector<2x1xf32> to vector<2x8xf32>
    %221 = arith.divf %217, %220 : vector<2x8xf32>
    %222 = vector.shape_cast %221 : vector<2x8xf32> to vector<2x8x1xf32>
    %223 = vector.broadcast %222 : vector<2x8x1xf32> to vector<2x8x32xf32>
    %224 = arith.mulf %223, %3 : vector<2x8x32xf32>
    %cst_90 = arith.constant dense<0.000000e+00> : vector<2x32xf32>
    %225 = vector.multi_reduction <add>, %224, %cst_90 [1] : vector<2x8x32xf32> to vector<2x32xf32>
    %226 = arith.index_cast %c3_i32 : i32 to index
    %c0_91 = arith.constant 0 : index
    %c0_92 = arith.constant 0 : index
    %227 = vector.load %arg4[%226, %c0_91, %c0_92] : memref<4x2x16xf32, #tpu.memory_space<vmem>>, vector<1x2x16xf32>
    %228 = vector.shape_cast %227 : vector<1x2x16xf32> to vector<2x16xf32>
    %cst_93 = arith.constant dense<0.000000e+00> : vector<2x128xf32>
    %229 = tpu.matmul %225, %7, %cst_93 {dimension_numbers = #tpu.dot_dimension_numbers<[1], [0], [0], [1], [0, 0, 1, 1], [], []>} : vector<2x32xf32>, vector<32x128xf32>, vector<2x128xf32> -> vector<2x128xf32>
    %cst_94 = arith.constant dense<0.000000e+00> : vector<2x128xf32>
    %230 = tpu.matmul %228, %8, %cst_94 {dimension_numbers = #tpu.dot_dimension_numbers<[1], [0], [0], [1], [0, 0, 1, 1], [], []>} : vector<2x16xf32>, vector<16x128xf32>, vector<2x128xf32> -> vector<2x128xf32>
    %231 = arith.addf %229, %230 : vector<2x128xf32>
    %cst_95 = arith.constant dense<0.000000e+00> : vector<2x128xf32>
    %232 = tpu.matmul %203, %9, %cst_95 {dimension_numbers = #tpu.dot_dimension_numbers<[1], [0], [0], [1], [0, 0, 1, 1], [], []>} : vector<2x32xf32>, vector<32x128xf32>, vector<2x128xf32> -> vector<2x128xf32>
    %233 = arith.addf %231, %232 : vector<2x128xf32>
    %234 = vector.broadcast %10 : vector<1x128xf32> to vector<2x128xf32>
    %235 = arith.addf %233, %234 : vector<2x128xf32>
    %236 = vector.extract_strided_slice %235 {offsets = [0, 0], sizes = [2, 32], strides = [1, 1]} : vector<2x128xf32> to vector<2x32xf32>
    %237 = arith.negf %236 : vector<2x32xf32>
    %238 = math.exp %237 : vector<2x32xf32>
    %cst_96 = arith.constant 1.000000e+00 : f32
    %239 = vector.broadcast %cst_96 : f32 to vector<2x32xf32>
    %240 = arith.addf %239, %238 : vector<2x32xf32>
    %241 = arith.divf %239, %240 : vector<2x32xf32>
    %242 = vector.extract_strided_slice %235 {offsets = [0, 32], sizes = [2, 32], strides = [1, 1]} : vector<2x128xf32> to vector<2x32xf32>
    %243 = arith.negf %242 : vector<2x32xf32>
    %244 = math.exp %243 : vector<2x32xf32>
    %cst_97 = arith.constant 1.000000e+00 : f32
    %245 = vector.broadcast %cst_97 : f32 to vector<2x32xf32>
    %246 = arith.addf %245, %244 : vector<2x32xf32>
    %247 = arith.divf %245, %246 : vector<2x32xf32>
    %248 = vector.extract_strided_slice %235 {offsets = [0, 64], sizes = [2, 32], strides = [1, 1]} : vector<2x128xf32> to vector<2x32xf32>
    %249 = math.tanh %248 : vector<2x32xf32>
    %250 = vector.extract_strided_slice %235 {offsets = [0, 96], sizes = [2, 32], strides = [1, 1]} : vector<2x128xf32> to vector<2x32xf32>
    %251 = arith.negf %250 : vector<2x32xf32>
    %252 = math.exp %251 : vector<2x32xf32>
    %cst_98 = arith.constant 1.000000e+00 : f32
    %253 = vector.broadcast %cst_98 : f32 to vector<2x32xf32>
    %254 = arith.addf %253, %252 : vector<2x32xf32>
    %255 = arith.divf %253, %254 : vector<2x32xf32>
    %256 = arith.mulf %247, %204 : vector<2x32xf32>
    %257 = arith.mulf %241, %249 : vector<2x32xf32>
    %258 = arith.addf %256, %257 : vector<2x32xf32>
    %259 = math.tanh %258 : vector<2x32xf32>
    %260 = arith.mulf %255, %259 : vector<2x32xf32>
    %c0_99 = arith.constant 0 : index
    %c0_100 = arith.constant 0 : index
    %261 = vector.load %arg14[%c0_99, %c0_100] : memref<2x32xf32, #tpu.memory_space<vmem>>, vector<2x32xf32>
    tpu.vector_store %arg14[%c0_99, %c0_100], %260 {strides = array<i32>} : memref<2x32xf32, #tpu.memory_space<vmem>>, vector<2x32xf32>,
    %c0_101 = arith.constant 0 : index
    %c0_102 = arith.constant 0 : index
    %262 = vector.load %arg15[%c0_101, %c0_102] : memref<2x32xf32, #tpu.memory_space<vmem>>, vector<2x32xf32>
    tpu.vector_store %arg15[%c0_101, %c0_102], %258 {strides = array<i32>} : memref<2x32xf32, #tpu.memory_space<vmem>>, vector<2x32xf32>,
    %263 = arith.index_cast %c3_i32 : i32 to index
    %c0_103 = arith.constant 0 : index
    %c0_104 = arith.constant 0 : index
    %264 = vector.load %arg13[%263, %c0_103, %c0_104] : memref<4x2x32xf32, #tpu.memory_space<vmem>>, vector<1x2x32xf32>
    %265 = vector.shape_cast %264 : vector<1x2x32xf32> to vector<2x32xf32>
    %266 = vector.shape_cast %260 : vector<2x32xf32> to vector<1x2x32xf32>
    tpu.vector_store %arg13[%263, %c0_103, %c0_104], %266 {strides = array<i32>} : memref<4x2x32xf32, #tpu.memory_space<vmem>>, vector<1x2x32xf32>,
    %c4_i32 = arith.constant 4 : i32
    return
  }
  func.func @transform_0(%arg0: i32, %arg1: i32) -> (i32, i32, i32) {
    %c0_i32 = arith.constant 0 : i32
    %c0_i32_0 = arith.constant 0 : i32
    %c0_i32_1 = arith.constant 0 : i32
    return %arg0, %c0_i32, %c0_i32_0 : i32, i32, i32
  }
  func.func @transform_1(%arg0: i32, %arg1: i32) -> (i32, i32) {
    %c0_i32 = arith.constant 0 : i32
    %c0_i32_0 = arith.constant 0 : i32
    return %arg0, %c0_i32 : i32, i32
  }
  func.func @transform_2(%arg0: i32, %arg1: i32) -> (i32, i32, i32) {
    %c0_i32 = arith.constant 0 : i32
    %c0_i32_0 = arith.constant 0 : i32
    return %arg1, %arg0, %c0_i32 : i32, i32, i32
  }
  func.func @transform_3(%arg0: i32, %arg1: i32) -> (i32, i32) {
    %c0_i32 = arith.constant 0 : i32
    %c0_i32_0 = arith.constant 0 : i32
    return %arg0, %c0_i32 : i32, i32
  }
  func.func @transform_4(%arg0: i32, %arg1: i32) -> (i32, i32) {
    %c0_i32 = arith.constant 0 : i32
    %c0_i32_0 = arith.constant 0 : i32
    return %arg0, %c0_i32 : i32, i32
  }
  func.func @transform_5(%arg0: i32, %arg1: i32) -> (i32, i32) {
    %c0_i32 = arith.constant 0 : i32
    %c0_i32_0 = arith.constant 0 : i32
    %c0_i32_1 = arith.constant 0 : i32
    return %c0_i32, %c0_i32_0 : i32, i32
  }
  func.func @transform_6(%arg0: i32, %arg1: i32) -> (i32, i32) {
    %c0_i32 = arith.constant 0 : i32
    %c0_i32_0 = arith.constant 0 : i32
    %c0_i32_1 = arith.constant 0 : i32
    return %c0_i32, %c0_i32_0 : i32, i32
  }
  func.func @transform_7(%arg0: i32, %arg1: i32) -> (i32, i32) {
    %c0_i32 = arith.constant 0 : i32
    %c0_i32_0 = arith.constant 0 : i32
    %c0_i32_1 = arith.constant 0 : i32
    return %c0_i32, %c0_i32_0 : i32, i32
  }
  func.func @transform_8(%arg0: i32, %arg1: i32) -> (i32, i32) {
    %c0_i32 = arith.constant 0 : i32
    %c0_i32_0 = arith.constant 0 : i32
    %c0_i32_1 = arith.constant 0 : i32
    return %c0_i32, %c0_i32_0 : i32, i32
  }
  func.func @transform_9(%arg0: i32, %arg1: i32) -> (i32, i32) {
    %c0_i32 = arith.constant 0 : i32
    %c0_i32_0 = arith.constant 0 : i32
    %c0_i32_1 = arith.constant 0 : i32
    return %c0_i32, %c0_i32_0 : i32, i32
  }
  func.func @transform_10(%arg0: i32, %arg1: i32) -> (i32, i32) {
    %c0_i32 = arith.constant 0 : i32
    %c0_i32_0 = arith.constant 0 : i32
    %c0_i32_1 = arith.constant 0 : i32
    return %c0_i32, %c0_i32_0 : i32, i32
  }
  func.func @transform_11(%arg0: i32, %arg1: i32) -> (i32, i32, i32) {
    %c0_i32 = arith.constant 0 : i32
    %c0_i32_0 = arith.constant 0 : i32
    return %arg1, %arg0, %c0_i32 : i32, i32, i32
  }
}

</mosaic_0001>

<llo_original>
// kernel: tpu_custom_call.1
$region0: #{tpu_custom_call.1}
  #allocation0 [shape = 'u32[]', space=smem, size = 0x4, offset = 0x4, fixed_abs, tag = 'smem constant byte address 0x4 - core index']
  #allocation1 [shape = 'u32[144,128]{1,0:T(1,128)}', space=vmem, size = 0x12000, scoped, tag = 'internal scratch']
  #allocation2 [shape = 'f32[2,32]{1,0:T(2,128)}', space=vmem, size = 0x400, scoped, tag = 'scratch operand']
  #allocation3 [shape = 'f32[2,32]{1,0:T(2,128)}', space=vmem, size = 0x400, scoped, tag = 'scratch operand']
  #allocation4 [shape = 'f32[1,1]{1,0:T(1,128)S(1)}', space=vmem, size = 0x200, scoped, tag = 'scoped memory for tpu_custom_call.1']
  %s0 = inlined_call_operand.hbm [shape: f32[2,8,32], index: 0, kind: input, shape index: {}]
  %s1 = inlined_call_operand.hbm [shape: f32[2,8], index: 1, kind: input, shape index: {}]
  %s2 = inlined_call_operand.hbm [shape: f32[8,2,16], index: 2, kind: input, shape index: {}]
  %s3 = inlined_call_operand.hbm [shape: f32[2,32], index: 3, kind: input, shape index: {}]
  %s4 = inlined_call_operand.hbm [shape: f32[2,32], index: 4, kind: input, shape index: {}]
  %s5 = inlined_call_operand.hbm [shape: f32[1,32], index: 5, kind: input, shape index: {}]
  %s6 = inlined_call_operand.<no memory space> [shape: f32[1,1], index: 6, kind: input, shape index: {}]
  %s7 = inlined_call_operand.hbm [shape: f32[32,128], index: 7, kind: input, shape index: {}]
  %s8 = inlined_call_operand.hbm [shape: f32[16,128], index: 8, kind: input, shape index: {}]
  %s9 = inlined_call_operand.hbm [shape: f32[32,128], index: 9, kind: input, shape index: {}]
  %s10 = inlined_call_operand.hbm [shape: f32[1,128], index: 10, kind: input, shape index: {}]
  %s11 = inlined_call_operand.hbm [shape: f32[8,2,32], index: 11, kind: output, shape index: {}]
  %s12 = sld [smem:[#allocation0]]
  $region121: #{tpu_custom_call.1} parent=0
    _
  %s14 = ssub.s32 1, %s12
  %s15 = scalar_select 0, %s14, %s12
  %v16 = vstv %s6
  %17 = vst [vmem:[#allocation4] sm:$0x1] %v16
  $region1: #{tpu_custom_call.1} parent=0
    #allocation5 [shape = 'u8[8192]{0}', space=vmem, size = 0x2000, scoped, tag = 'input window, operand 0, single buffered']
    #allocation6 [shape = 's32[2]{0}', space=sflag, size = 0x8, scoped, tag = 'scoped memory for tpu_custom_call.1']
    #allocation7 [shape = 's32[2]{0}', space=sflag, size = 0x8, scoped, tag = 'scoped memory for tpu_custom_call.1']
    #allocation8 [shape = 'u8[1024]{0}', space=vmem, size = 0x400, scoped, tag = 'input window, operand 1, single buffered']
    #allocation9 [shape = 's32[1]{0}', space=sflag, size = 0x4, scoped, tag = 'scoped memory for tpu_custom_call.1']
    #allocation10 [shape = 'u8[8192]{0}', space=vmem, size = 0x2000, scoped, tag = 'input window, operand 2']
    #allocation11 [shape = 'u8[1024]{0}', space=vmem, size = 0x400, scoped, tag = 'input window, operand 3, single buffered']
    #allocation12 [shape = 'u8[1024]{0}', space=vmem, size = 0x400, scoped, tag = 'input window, operand 4, single buffered']
    #allocation13 [shape = 's32[1]{0}', space=sflag, size = 0x4, scoped, tag = 'scoped memory for tpu_custom_call.1']
    #allocation14 [shape = 'u8[512]{0}', space=vmem, size = 0x400, scoped, tag = 'input window, operand 5, single buffered']
    #allocation15 [shape = 'u8[16384]{0}', space=vmem, size = 0x4000, scoped, tag = 'input window, operand 7, single buffered']
    #allocation16 [shape = 's32[1]{0}', space=sflag, size = 0x4, scoped, tag = 'scoped memory for tpu_custom_call.1']
    #allocation17 [shape = 'u8[8192]{0}', space=vmem, size = 0x2000, scoped, tag = 'input window, operand 8, single buffered']
    #allocation18 [shape = 'u8[16384]{0}', space=vmem, size = 0x4000, scoped, tag = 'input window, operand 9, single buffered']
    #allocation19 [shape = 's32[1]{0}', space=sflag, size = 0x4, scoped, tag = 'scoped memory for tpu_custom_call.1']
    #allocation20 [shape = 'u8[512]{0}', space=vmem, size = 0x400, scoped, tag = 'input window, operand 10, single buffered']
    #allocation21 [shape = 'u8[8192]{0}', space=vmem, size = 0x2000, scoped, tag = 'output window, operand 0']
    %18 = vsyncpa [#allocation6], 0
    %19 = vsyncpa [#allocation9], 0
    %20 = vsyncpa [#allocation13], 0
    %21 = vsyncpa [#allocation16], 0
    %22 = vsyncpa [#allocation19], 0
    %23 = vsyncpa [#allocation7], 0
    %s24 = scalar_lea.sflag [#allocation7], 1
    %25 = vsyncpa %s24, 0
    loop: start=0, step=1, limit=4
    $region2: #{tpu_custom_call.1} parent=1 // loop_pre_header
      _
    $region3: #{tpu_custom_call.1} parent=1 // loop_header
      %s27 = sphi 0, %s31
      %p28 = scmp.ge.s32.totalorder %s27, 4
      %s34 = sphi 0, %s46
      %s35 = sphi 0, %s42
      %s36 = sphi 0, %s34
      %s37 = sphi 0, %s35
      %s38 = sphi 0, %s36
      %s39 = sphi 0, %s37
      %s49 = sphi 0, %s51
      %s52 = sphi 0, %s49
      %s53 = sphi 0, %s52
      %s69 = sphi 0, %s53
      %s75 = sphi 0, %s77
      %s78 = sphi 0, %s75
      %s79 = sphi 0, %s78
      %s95 = sphi 0, %s79
      %s103 = sphi 0, %s105
      %s106 = sphi 0, %s103
      %s107 = sphi 0, %s106
      %s123 = sphi 0, %s107
      %s129 = sphi 0, %s131
      %s132 = sphi 0, %s129
      %s133 = sphi 0, %s132
      %s149 = sphi 0, %s133
      %s155 = sphi 0, %s157
      %s158 = sphi 0, %s155
      %s159 = sphi 0, %s158
      %s175 = sphi 0, %s159
      %s179 = sphi 0, %s179
      %s181 = sphi 0, %s179
      %s182 = sphi 0, %s181
      %s196 = sphi 0, %s182
      %s200 = sphi 0, %s200
      %s202 = sphi 0, %s200
      %s203 = sphi 0, %s202
      %s217 = sphi 0, %s203
      %s221 = sphi 0, %s221
      %s223 = sphi 0, %s221
      %s224 = sphi 0, %s223
      %s238 = sphi 0, %s224
      %s242 = sphi 0, %s242
      %s244 = sphi 0, %s242
      %s245 = sphi 0, %s244
      %s259 = sphi 0, %s245
      %s263 = sphi 0, %s263
      %s265 = sphi 0, %s263
      %s266 = sphi 0, %s265
      %s280 = sphi 0, %s266
      %s284 = sphi 0, %s284
      %s286 = sphi 0, %s284
      %s287 = sphi 0, %s286
      %s301 = sphi 0, %s287
      %s309 = sphi 0, %s311
      %s312 = sphi 0, %s309
      %s313 = sphi 0, %s312
      %s329 = sphi 0, %s313
    $region4: #{tpu_custom_call.1} parent=1 // loop_header_branch
      %30 = sbr.rel (%p28) target = $region8
    $region5: #{tpu_custom_call.1} parent=1 // loop_body
      %s32 = ssub.s32 %s27, 1
      %s33 = ssub.s32 %s27, 2
      %s40 = sadd.s32 1, %s35
      %p41 = scmp.ge.s32.totalorder %s40, 2
      %s42 = scalar_select %p41, 0, %s40
      %s43 = sadd.s32 1, %s34
      %s44 = scalar_select %p41, %s43, %s34
      %p45 = scmp.ge.s32.totalorder %s44, 1
      %s46 = scalar_select %p45, 0, %s44
      %s47 = ssub.s32 %s34, %s46
      %p48 = scmp.eq.s32.totalorder %s47, 0
      %s50 = sadd.s32 %s49, 1
      %s51 = scalar_select %p48, %s49, %s50
      %p54 = pneg %p48
      %p55 = scmp.eq.s32.totalorder %s27, 1
      %p56 = por %p54, %p55
      %p57 = scmp.ne.s32.totalorder %s49, %s52
      %p58 = scmp.eq.s32.totalorder %s27, 0
      %p59 = por %p57, %p58
      %p60 = scmp.ne.s32.totalorder %s49, %s52
      %p61 = scmp.eq.s32.totalorder %s32, 1
      %p62 = por %p60, %p61
      %p63 = scmp.ne.s32.totalorder %s52, %s53
      %p64 = scmp.eq.s32.totalorder %s32, 0
      %p65 = por %p63, %p64
      %p66 = scmp.ne.s32.totalorder %s52, %s53
      %p67 = scmp.eq.s32.totalorder %s33, 1
      %p68 = por %p66, %p67
      %p70 = scmp.ne.s32.totalorder %s53, %s69
      %p71 = scmp.eq.s32.totalorder %s33, 0
      %p72 = por %p70, %p71
      %s73 = ssub.s32 %s34, %s46
      %p74 = scmp.eq.s32.totalorder %s73, 0
      %s76 = sadd.s32 %s75, 1
      %s77 = scalar_select %p74, %s75, %s76
      %p80 = pneg %p74
      %p81 = scmp.eq.s32.totalorder %s27, 1
      %p82 = por %p80, %p81
      %p83 = scmp.ne.s32.totalorder %s75, %s78
      %p84 = scmp.eq.s32.totalorder %s27, 0
      %p85 = por %p83, %p84
      %p86 = scmp.ne.s32.totalorder %s75, %s78
      %p87 = scmp.eq.s32.totalorder %s32, 1
      %p88 = por %p86, %p87
      %p89 = scmp.ne.s32.totalorder %s78, %s79
      %p90 = scmp.eq.s32.totalorder %s32, 0
      %p91 = por %p89, %p90
      %p92 = scmp.ne.s32.totalorder %s78, %s79
      %p93 = scmp.eq.s32.totalorder %s33, 1
      %p94 = por %p92, %p93
      %p96 = scmp.ne.s32.totalorder %s79, %s95
      %p97 = scmp.eq.s32.totalorder %s33, 0
      %p98 = por %p96, %p97
      %s99 = ssub.s32 %s35, %s42
      %s100 = ssub.s32 %s34, %s46
      %s101 = sor.u32 %s99, %s100
      %p102 = scmp.eq.s32.totalorder %s101, 0
      %s104 = sadd.s32 %s103, 1
      %s105 = scalar_select %p102, %s103, %s104
      %p108 = pneg %p102
      %p109 = scmp.eq.s32.totalorder %s27, 1
      %p110 = por %p108, %p109
      %p111 = scmp.ne.s32.totalorder %s103, %s106
      %p112 = scmp.eq.s32.totalorder %s27, 0
      %p113 = por %p111, %p112
      %p114 = scmp.ne.s32.totalorder %s103, %s106
      %p115 = scmp.eq.s32.totalorder %s32, 1
      %p116 = por %p114, %p115
      %p117 = scmp.ne.s32.totalorder %s106, %s107
      %p118 = scmp.eq.s32.totalorder %s32, 0
      %p119 = por %p117, %p118
      %p120 = scmp.ne.s32.totalorder %s106, %s107
      %p121 = scmp.eq.s32.totalorder %s33, 1
      %p122 = por %p120, %p121
      %p124 = scmp.ne.s32.totalorder %s107, %s123
      %p125 = scmp.eq.s32.totalorder %s33, 0
      %p126 = por %p124, %p125
      %s127 = ssub.s32 %s34, %s46
      %p128 = scmp.eq.s32.totalorder %s127, 0
      %s130 = sadd.s32 %s129, 1
      %s131 = scalar_select %p128, %s129, %s130
      %p134 = pneg %p128
      %p135 = scmp.eq.s32.totalorder %s27, 1
      %p136 = por %p134, %p135
      %p137 = scmp.ne.s32.totalorder %s129, %s132
      %p138 = scmp.eq.s32.totalorder %s27, 0
      %p139 = por %p137, %p138
      %p140 = scmp.ne.s32.totalorder %s129, %s132
      %p141 = scmp.eq.s32.totalorder %s32, 1
      %p142 = por %p140, %p141
      %p143 = scmp.ne.s32.totalorder %s132, %s133
      %p144 = scmp.eq.s32.totalorder %s32, 0
      %p145 = por %p143, %p144
      %p146 = scmp.ne.s32.totalorder %s132, %s133
      %p147 = scmp.eq.s32.totalorder %s33, 1
      %p148 = por %p146, %p147
      %p150 = scmp.ne.s32.totalorder %s133, %s149
      %p151 = scmp.eq.s32.totalorder %s33, 0
      %p152 = por %p150, %p151
      %s153 = ssub.s32 %s34, %s46
      %p154 = scmp.eq.s32.totalorder %s153, 0
      %s156 = sadd.s32 %s155, 1
      %s157 = scalar_select %p154, %s155, %s156
      %p160 = pneg %p154
      %p161 = scmp.eq.s32.totalorder %s27, 1
      %p162 = por %p160, %p161
      %p163 = scmp.ne.s32.totalorder %s155, %s158
      %p164 = scmp.eq.s32.totalorder %s27, 0
      %p165 = por %p163, %p164
      %p166 = scmp.ne.s32.totalorder %s155, %s158
      %p167 = scmp.eq.s32.totalorder %s32, 1
      %p168 = por %p166, %p167
      %p169 = scmp.ne.s32.totalorder %s158, %s159
      %p170 = scmp.eq.s32.totalorder %s32, 0
      %p171 = por %p169, %p170
      %p172 = scmp.ne.s32.totalorder %s158, %s159
      %p173 = scmp.eq.s32.totalorder %s33, 1
      %p174 = por %p172, %p173
      %p176 = scmp.ne.s32.totalorder %s159, %s175
      %p177 = scmp.eq.s32.totalorder %s33, 0
      %p178 = por %p176, %p177
      %s180 = sadd.s32 %s179, 1
      %p183 = scmp.eq.s32.totalorder %s27, 1
      %p184 = scmp.ne.s32.totalorder %s179, %s181
      %p185 = scmp.eq.s32.totalorder %s27, 0
      %p186 = por %p184, %p185
      %p187 = scmp.ne.s32.totalorder %s179, %s181
      %p188 = scmp.eq.s32.totalorder %s32, 1
      %p189 = por %p187, %p188
      %p190 = scmp.ne.s32.totalorder %s181, %s182
      %p191 = scmp.eq.s32.totalorder %s32, 0
      %p192 = por %p190, %p191
      %p193 = scmp.ne.s32.totalorder %s181, %s182
      %p194 = scmp.eq.s32.totalorder %s33, 1
      %p195 = por %p193, %p194
      %p197 = scmp.ne.s32.totalorder %s182, %s196
      %p198 = scmp.eq.s32.totalorder %s33, 0
      %p199 = por %p197, %p198
      %s201 = sadd.s32 %s200, 1
      %p204 = scmp.eq.s32.totalorder %s27, 1
      %p205 = scmp.ne.s32.totalorder %s200, %s202
      %p206 = scmp.eq.s32.totalorder %s27, 0
      %p207 = por %p205, %p206
      %p208 = scmp.ne.s32.totalorder %s200, %s202
      %p209 = scmp.eq.s32.totalorder %s32, 1
      %p210 = por %p208, %p209
      %p211 = scmp.ne.s32.totalorder %s202, %s203
      %p212 = scmp.eq.s32.totalorder %s32, 0
      %p213 = por %p211, %p212
      %p214 = scmp.ne.s32.totalorder %s202, %s203
      %p215 = scmp.eq.s32.totalorder %s33, 1
      %p216 = por %p214, %p215
      %p218 = scmp.ne.s32.totalorder %s203, %s217
      %p219 = scmp.eq.s32.totalorder %s33, 0
      %p220 = por %p218, %p219
      %s222 = sadd.s32 %s221, 1
      %p225 = scmp.eq.s32.totalorder %s27, 1
      %p226 = scmp.ne.s32.totalorder %s221, %s223
      %p227 = scmp.eq.s32.totalorder %s27, 0
      %p228 = por %p226, %p227
      %p229 = scmp.ne.s32.totalorder %s221, %s223
      %p230 = scmp.eq.s32.totalorder %s32, 1
      %p231 = por %p229, %p230
      %p232 = scmp.ne.s32.totalorder %s223, %s224
      %p233 = scmp.eq.s32.totalorder %s32, 0
      %p234 = por %p232, %p233
      %p235 = scmp.ne.s32.totalorder %s223, %s224
      %p236 = scmp.eq.s32.totalorder %s33, 1
      %p237 = por %p235, %p236
      %p239 = scmp.ne.s32.totalorder %s224, %s238
      %p240 = scmp.eq.s32.totalorder %s33, 0
      %p241 = por %p239, %p240
      %s243 = sadd.s32 %s242, 1
      %p246 = scmp.eq.s32.totalorder %s27, 1
      %p247 = scmp.ne.s32.totalorder %s242, %s244
      %p248 = scmp.eq.s32.totalorder %s27, 0
      %p249 = por %p247, %p248
      %p250 = scmp.ne.s32.totalorder %s242, %s244
      %p251 = scmp.eq.s32.totalorder %s32, 1
      %p252 = por %p250, %p251
      %p253 = scmp.ne.s32.totalorder %s244, %s245
      %p254 = scmp.eq.s32.totalorder %s32, 0
      %p255 = por %p253, %p254
      %p256 = scmp.ne.s32.totalorder %s244, %s245
      %p257 = scmp.eq.s32.totalorder %s33, 1
      %p258 = por %p256, %p257
      %p260 = scmp.ne.s32.totalorder %s245, %s259
      %p261 = scmp.eq.s32.totalorder %s33, 0
      %p262 = por %p260, %p261
      %s264 = sadd.s32 %s263, 1
      %p267 = scmp.eq.s32.totalorder %s27, 1
      %p268 = scmp.ne.s32.totalorder %s263, %s265
      %p269 = scmp.eq.s32.totalorder %s27, 0
      %p270 = por %p268, %p269
      %p271 = scmp.ne.s32.totalorder %s263, %s265
      %p272 = scmp.eq.s32.totalorder %s32, 1
      %p273 = por %p271, %p272
      %p274 = scmp.ne.s32.totalorder %s265, %s266
      %p275 = scmp.eq.s32.totalorder %s32, 0
      %p276 = por %p274, %p275
      %p277 = scmp.ne.s32.totalorder %s265, %s266
      %p278 = scmp.eq.s32.totalorder %s33, 1
      %p279 = por %p277, %p278
      %p281 = scmp.ne.s32.totalorder %s266, %s280
      %p282 = scmp.eq.s32.totalorder %s33, 0
      %p283 = por %p281, %p282
      %s285 = sadd.s32 %s284, 1
      %p288 = scmp.eq.s32.totalorder %s27, 1
      %p289 = scmp.ne.s32.totalorder %s284, %s286
      %p290 = scmp.eq.s32.totalorder %s27, 0
      %p291 = por %p289, %p290
      %p292 = scmp.ne.s32.totalorder %s284, %s286
      %p293 = scmp.eq.s32.totalorder %s32, 1
      %p294 = por %p292, %p293
      %p295 = scmp.ne.s32.totalorder %s286, %s287
      %p296 = scmp.eq.s32.totalorder %s32, 0
      %p297 = por %p295, %p296
      %p298 = scmp.ne.s32.totalorder %s286, %s287
      %p299 = scmp.eq.s32.totalorder %s33, 1
      %p300 = por %p298, %p299
      %p302 = scmp.ne.s32.totalorder %s287, %s301
      %p303 = scmp.eq.s32.totalorder %s33, 0
      %p304 = por %p302, %p303
      %s305 = ssub.s32 %s35, %s42
      %s306 = ssub.s32 %s34, %s46
      %s307 = sor.u32 %s305, %s306
      %p308 = scmp.eq.s32.totalorder %s307, 0
      %s310 = sadd.s32 %s309, 1
      %s311 = scalar_select %p308, %s309, %s310
      %p314 = pneg %p308
      %p315 = scmp.eq.s32.totalorder %s27, 1
      %p316 = por %p314, %p315
      %p317 = scmp.ne.s32.totalorder %s309, %s312
      %p318 = scmp.eq.s32.totalorder %s27, 0
      %p319 = por %p317, %p318
      %p320 = scmp.ne.s32.totalorder %s309, %s312
      %p321 = scmp.eq.s32.totalorder %s32, 1
      %p322 = por %p320, %p321
      %p323 = scmp.ne.s32.totalorder %s312, %s313
      %p324 = scmp.eq.s32.totalorder %s32, 0
      %p325 = por %p323, %p324
      %p326 = scmp.ne.s32.totalorder %s312, %s313
      %p327 = scmp.eq.s32.totalorder %s33, 1
      %p328 = por %p326, %p327
      %p330 = scmp.ne.s32.totalorder %s313, %s329
      %p331 = scmp.eq.s32.totalorder %s33, 0
      %p332 = por %p330, %p331
      %p333 = scmp.le.s32.totalorder 1, %s27
      %p334 = scmp.lt.s32.totalorder %s27, 3
      %p335 = pnand %p333, %p334
      %p336 = pneg %p335
      // Predicated region
      $region9: #{tpu_custom_call.1} parent=5 // pred_check
        _
      $region10: #{tpu_custom_call.1} parent=5 // pred_check_branch
        %338 = sbr.rel (%p335) target = $region12
      $region11: #{tpu_custom_call.1} parent=5 // pred_region
        %s339 = ssub.s32 %s27, 1
        // Predicated region
        $region13: #{tpu_custom_call.1} parent=11 // pred_check
          %p340 = pneg %p65
        $region14: #{tpu_custom_call.1} parent=11 // pred_check_branch
          %342 = sbr.rel (%p340) target = $region16
        $region15: #{tpu_custom_call.1} parent=11 // pred_region
          %s343 = smul.u32 2, %s36
          %s345 = ssub.s32 256, 256
          %346 = vsyncadd [#allocation6], %s345
          %s347 = smul.addr %s343, 128
          %s348 = scalar_lea.hbm %s0, %s347
          %s349 = sshll.u32 [#allocation5], 4
          %s350 = int_to_ptr.vmem [resolvable:$true] %s349
          %355 = dma.hbm_to_vmem [thread:$0]  %s348, 256, %s350, [#allocation6], 128, 128, 8
        $region16: #{tpu_custom_call.1} parent=11 // pred_fallthru
          _
        // Predicated region
        $region17: #{tpu_custom_call.1} parent=11 // pred_check
          %p356 = pneg %p91
        $region18: #{tpu_custom_call.1} parent=11 // pred_check_branch
          %358 = sbr.rel (%p356) target = $region20
        $region19: #{tpu_custom_call.1} parent=11 // pred_region
          %s360 = ssub.s32 32, 32
          %361 = vsyncadd [#allocation9], %s360
          %s362 = smul.addr %s36, 32
          %s363 = scalar_lea.hbm %s1, %s362
          %s365 = sshll.u32 [#allocation8], 4
          %s366 = int_to_ptr.vmem [resolvable:$true] %s365
          %368 = dma.hbm_to_vmem [thread:$0]  %s363, 32, %s366, [#allocation9]
        $region20: #{tpu_custom_call.1} parent=11 // pred_fallthru
          _
        // Predicated region
        $region21: #{tpu_custom_call.1} parent=11 // pred_check
          %p369 = pneg %p145
        $region22: #{tpu_custom_call.1} parent=11 // pred_check_branch
          %371 = sbr.rel (%p369) target = $region24
        $region23: #{tpu_custom_call.1} parent=11 // pred_region
          %s373 = ssub.s32 32, 32
          %374 = vsyncadd [#allocation9], %s373
          %s375 = smul.addr %s36, 32
          %s376 = scalar_lea.hbm %s3, %s375
          %s378 = sshll.u32 [#allocation11], 4
          %s379 = int_to_ptr.vmem [resolvable:$true] %s378
          %381 = dma.hbm_to_vmem [thread:$0]  %s376, 32, %s379, [#allocation9]
        $region24: #{tpu_custom_call.1} parent=11 // pred_fallthru
          _
        // Predicated region
        $region25: #{tpu_custom_call.1} parent=11 // pred_check
          %p382 = pneg %p171
        $region26: #{tpu_custom_call.1} parent=11 // pred_check_branch
          %384 = sbr.rel (%p382) target = $region28
        $region27: #{tpu_custom_call.1} parent=11 // pred_region
          %s386 = ssub.s32 32, 32
          %387 = vsyncadd [#allocation13], %s386
          %s388 = smul.addr %s36, 32
          %s389 = scalar_lea.hbm %s4, %s388
          %s391 = sshll.u32 [#allocation12], 4
          %s392 = int_to_ptr.vmem [resolvable:$true] %s391
          %394 = dma.hbm_to_vmem [thread:$0]  %s389, 32, %s392, [#allocation13]
        $region28: #{tpu_custom_call.1} parent=11 // pred_fallthru
          _
        // Predicated region
        $region29: #{tpu_custom_call.1} parent=11 // pred_check
          %p395 = pneg %p192
        $region30: #{tpu_custom_call.1} parent=11 // pred_check_branch
          %397 = sbr.rel (%p395) target = $region32
        $region31: #{tpu_custom_call.1} parent=11 // pred_region
          %s399 = ssub.s32 16, 16
          %400 = vsyncadd [#allocation13], %s399
          %s402 = sshll.u32 [#allocation14], 4
          %s403 = int_to_ptr.vmem [resolvable:$true] %s402
          %405 = dma.hbm_to_vmem [thread:$0]  %s5, 16, %s403, [#allocation13]
        $region32: #{tpu_custom_call.1} parent=11 // pred_fallthru
          _
        // Predicated region
        $region33: #{tpu_custom_call.1} parent=11 // pred_check
          %p406 = pneg %p213
        $region34: #{tpu_custom_call.1} parent=11 // pred_check_branch
          %408 = sbr.rel (%p406) target = $region36
        $region35: #{tpu_custom_call.1} parent=11 // pred_region
          _
        $region36: #{tpu_custom_call.1} parent=11 // pred_fallthru
          _
        // Predicated region
        $region37: #{tpu_custom_call.1} parent=11 // pred_check
          %p409 = pneg %p234
        $region38: #{tpu_custom_call.1} parent=11 // pred_check_branch
          %411 = sbr.rel (%p409) target = $region40
        $region39: #{tpu_custom_call.1} parent=11 // pred_region
          %s413 = ssub.s32 512, 512
          %414 = vsyncadd [#allocation16], %s413
          %s415 = sshll.u32 [#allocation15], 4
          %s416 = int_to_ptr.vmem [resolvable:$true] %s415
          %421 = dma.hbm_to_vmem [thread:$0]  %s7, 512, %s416, [#allocation16], 128, 128, 8
        $region40: #{tpu_custom_call.1} parent=11 // pred_fallthru
          _
        // Predicated region
        $region41: #{tpu_custom_call.1} parent=11 // pred_check
          %p422 = pneg %p255
        $region42: #{tpu_custom_call.1} parent=11 // pred_check_branch
          %424 = sbr.rel (%p422) target = $region44
        $region43: #{tpu_custom_call.1} parent=11 // pred_region
          %s426 = ssub.s32 256, 256
          %427 = vsyncadd [#allocation16], %s426
          %s428 = sshll.u32 [#allocation17], 4
          %s429 = int_to_ptr.vmem [resolvable:$true] %s428
          %434 = dma.hbm_to_vmem [thread:$0]  %s8, 256, %s429, [#allocation16], 128, 128, 8
        $region44: #{tpu_custom_call.1} parent=11 // pred_fallthru
          _
        // Predicated region
        $region45: #{tpu_custom_call.1} parent=11 // pred_check
          %p435 = pneg %p276
        $region46: #{tpu_custom_call.1} parent=11 // pred_check_branch
          %437 = sbr.rel (%p435) target = $region48
        $region47: #{tpu_custom_call.1} parent=11 // pred_region
          %s439 = ssub.s32 512, 512
          %440 = vsyncadd [#allocation19], %s439
          %s441 = sshll.u32 [#allocation18], 4
          %s442 = int_to_ptr.vmem [resolvable:$true] %s441
          %447 = dma.hbm_to_vmem [thread:$0]  %s9, 512, %s442, [#allocation19], 128, 128, 8
        $region48: #{tpu_custom_call.1} parent=11 // pred_fallthru
          _
        // Predicated region
        $region49: #{tpu_custom_call.1} parent=11 // pred_check
          %p448 = pneg %p297
        $region50: #{tpu_custom_call.1} parent=11 // pred_check_branch
          %450 = sbr.rel (%p448) target = $region52
        $region51: #{tpu_custom_call.1} parent=11 // pred_region
          %s452 = ssub.s32 16, 16
          %453 = vsyncadd [#allocation19], %s452
          %s455 = sshll.u32 [#allocation20], 4
          %s456 = int_to_ptr.vmem [resolvable:$true] %s455
          %458 = dma.hbm_to_vmem [thread:$0]  %s10, 16, %s456, [#allocation19]
        $region52: #{tpu_custom_call.1} parent=11 // pred_fallthru
          _
      $region12: #{tpu_custom_call.1} parent=5 // pred_fallthru
        _
      %p459 = scmp.lt.s32.totalorder %s27, 2
      // Predicated region
      $region53: #{tpu_custom_call.1} parent=5 // pred_check
        %p460 = pneg %p459
      $region54: #{tpu_custom_call.1} parent=5 // pred_check_branch
        %462 = sbr.rel (%p460) target = $region56
      $region55: #{tpu_custom_call.1} parent=5 // pred_region
        // Predicated region
        $region57: #{tpu_custom_call.1} parent=55 // pred_check
          %p463 = pneg %p113
        $region58: #{tpu_custom_call.1} parent=55 // pred_check_branch
          %465 = sbr.rel (%p463) target = $region60
        $region59: #{tpu_custom_call.1} parent=55 // pred_region
          %s466 = sand.u32 %s27, 1
          %s467 = scalar_lea.sflag [#allocation6], %s466
          %s468 = sand.u32 %s103, 1
          %s469 = smul.addr %s468, 8
          %s470 = scalar_lea.vmem [#allocation10], %s469
          %s471 = smul.u32 4, %s35
          %s473 = ssub.s32 128, 128
          %474 = vsyncadd %s467, %s473
          %s475 = sadd.s32 %s34, %s471
          %s476 = smul.addr %s475, 32
          %s477 = scalar_lea.hbm %s2, %s476
          %s478 = sshll.u32 %s470, 4
          %s479 = int_to_ptr.vmem [resolvable:$true] %s478
          %484 = dma.hbm_to_vmem [thread:$0]  %s477, 128, %s479, %s467, 32, 32, 2
        $region60: #{tpu_custom_call.1} parent=55 // pred_fallthru
          _
      $region56: #{tpu_custom_call.1} parent=5 // pred_fallthru
        _
      %p485 = scmp.le.s32.totalorder 1, %s27
      %p486 = scmp.lt.s32.totalorder %s27, 3
      %p487 = pnand %p485, %p486
      %p488 = pneg %p487
      // Predicated region
      $region61: #{tpu_custom_call.1} parent=5 // pred_check
        _
      $region62: #{tpu_custom_call.1} parent=5 // pred_check_branch
        %490 = sbr.rel (%p487) target = $region64
      $region63: #{tpu_custom_call.1} parent=5 // pred_region
        %s491 = ssub.s32 %s27, 1
        // Predicated region
        $region65: #{tpu_custom_call.1} parent=63 // pred_check
          %p492 = pneg %p65
        $region66: #{tpu_custom_call.1} parent=63 // pred_check_branch
          %494 = sbr.rel (%p492) target = $region68
        $region67: #{tpu_custom_call.1} parent=63 // pred_region
          %495 = dma.done [#allocation6], 256
        $region68: #{tpu_custom_call.1} parent=63 // pred_fallthru
          _
        // Predicated region
        $region69: #{tpu_custom_call.1} parent=63 // pred_check
          %p496 = pneg %p91
        $region70: #{tpu_custom_call.1} parent=63 // pred_check_branch
          %498 = sbr.rel (%p496) target = $region72
        $region71: #{tpu_custom_call.1} parent=63 // pred_region
          %499 = dma.done [#allocation9], 32
        $region72: #{tpu_custom_call.1} parent=63 // pred_fallthru
          _
        %s500 = sand.u32 %s32, 1
        %s501 = scalar_lea.sflag [#allocation6], %s500
        %s502 = sand.u32 %s106, 1
        %s503 = smul.addr %s502, 8
        %s504 = scalar_lea.vmem [#allocation10], %s503
        // Predicated region
        $region73: #{tpu_custom_call.1} parent=63 // pred_check
          %p505 = pneg %p119
        $region74: #{tpu_custom_call.1} parent=63 // pred_check_branch
          %507 = sbr.rel (%p505) target = $region76
        $region75: #{tpu_custom_call.1} parent=63 // pred_region
          %508 = dma.done %s501, 128
        $region76: #{tpu_custom_call.1} parent=63 // pred_fallthru
          _
        // Predicated region
        $region77: #{tpu_custom_call.1} parent=63 // pred_check
          %p509 = pneg %p145
        $region78: #{tpu_custom_call.1} parent=63 // pred_check_branch
          %511 = sbr.rel (%p509) target = $region80
        $region79: #{tpu_custom_call.1} parent=63 // pred_region
          %512 = dma.done [#allocation9], 32
        $region80: #{tpu_custom_call.1} parent=63 // pred_fallthru
          _
        // Predicated region
        $region81: #{tpu_custom_call.1} parent=63 // pred_check
          %p513 = pneg %p171
        $region82: #{tpu_custom_call.1} parent=63 // pred_check_branch
          %515 = sbr.rel (%p513) target = $region84
        $region83: #{tpu_custom_call.1} parent=63 // pred_region
          %516 = dma.done [#allocation13], 32
        $region84: #{tpu_custom_call.1} parent=63 // pred_fallthru
          _
        // Predicated region
        $region85: #{tpu_custom_call.1} parent=63 // pred_check
          %p517 = pneg %p192
        $region86: #{tpu_custom_call.1} parent=63 // pred_check_branch
          %519 = sbr.rel (%p517) target = $region88
        $region87: #{tpu_custom_call.1} parent=63 // pred_region
          %520 = dma.done [#allocation13], 16
        $region88: #{tpu_custom_call.1} parent=63 // pred_fallthru
          _
        // Predicated region
        $region89: #{tpu_custom_call.1} parent=63 // pred_check
          %p521 = pneg %p234
        $region90: #{tpu_custom_call.1} parent=63 // pred_check_branch
          %523 = sbr.rel (%p521) target = $region92
        $region91: #{tpu_custom_call.1} parent=63 // pred_region
          %524 = dma.done [#allocation16], 512
        $region92: #{tpu_custom_call.1} parent=63 // pred_fallthru
          _
        // Predicated region
        $region93: #{tpu_custom_call.1} parent=63 // pred_check
          %p525 = pneg %p255
        $region94: #{tpu_custom_call.1} parent=63 // pred_check_branch
          %527 = sbr.rel (%p525) target = $region96
        $region95: #{tpu_custom_call.1} parent=63 // pred_region
          %528 = dma.done [#allocation16], 256
        $region96: #{tpu_custom_call.1} parent=63 // pred_fallthru
          _
        // Predicated region
        $region97: #{tpu_custom_call.1} parent=63 // pred_check
          %p529 = pneg %p276
        $region98: #{tpu_custom_call.1} parent=63 // pred_check_branch
          %531 = sbr.rel (%p529) target = $region100
        $region99: #{tpu_custom_call.1} parent=63 // pred_region
          %532 = dma.done [#allocation19], 512
        $region100: #{tpu_custom_call.1} parent=63 // pred_fallthru
          _
        // Predicated region
        $region101: #{tpu_custom_call.1} parent=63 // pred_check
          %p533 = pneg %p297
        $region102: #{tpu_custom_call.1} parent=63 // pred_check_branch
          %535 = sbr.rel (%p533) target = $region104
        $region103: #{tpu_custom_call.1} parent=63 // pred_region
          %536 = dma.done [#allocation19], 16
        $region104: #{tpu_custom_call.1} parent=63 // pred_fallthru
          _
        %p537 = pneg %p65
        %p538 = pneg %p62
        %p539 = pneg %p91
        %p540 = pneg %p88
        %s541 = sand.u32 %s32, 1
        %s542 = scalar_lea.sflag [#allocation6], %s541
        %s543 = sand.u32 %s106, 1
        %s544 = smul.addr %s543, 8
        %s545 = scalar_lea.vmem [#allocation10], %s544
        %p546 = pneg %p119
        %p547 = pneg %p116
        %p548 = pneg %p145
        %p549 = pneg %p142
        %p550 = pneg %p171
        %p551 = pneg %p168
        %p552 = pneg %p192
        %p553 = pneg %p189
        %p554 = pneg %p213
        %p555 = pneg %p210
        %p556 = pneg %p234
        %p557 = pneg %p231
        %p558 = pneg %p255
        %p559 = pneg %p252
        %p560 = pneg %p276
        %p561 = pneg %p273
        %p562 = pneg %p297
        %p563 = pneg %p294
        %p564 = pneg %p325
        %p565 = pneg %p322
        %s566 = sand.u32 %s312, 1
        %s567 = scalar_lea.sflag [#allocation7], %s566
        %s568 = sand.u32 %s312, 1
        %s569 = smul.addr %s568, 8
        %s570 = scalar_lea.vmem [#allocation21], %s569
        %s571 = smul.u32 2, %s36
        %s572 = smul.u32 4, %s37
        %s573 = smul.u32 4, %s37
        %p574 = scmp.eq.s32.totalorder %s37, 0
        // Predicated region
        $region105: #{tpu_custom_call.1} parent=63 // pred_check
          %p575 = pneg %p574
        $region106: #{tpu_custom_call.1} parent=63 // pred_check_branch
          %577 = sbr.rel (%p575) target = $region108
        $region107: #{tpu_custom_call.1} parent=63 // pred_region
          %v578 = vld [vmem:[#allocation11] sm:$0x3]
          %vm579 = vcmask 254976
          %580 = vst.msk [vmem:[#allocation2] sm:$0x3] %vm579, %v578
          %v581 = vld [vmem:[#allocation12] sm:$0x3]
          %582 = vst.msk [vmem:[#allocation3] sm:$0x3] %vm579, %v581
        $region108: #{tpu_custom_call.1} parent=63 // pred_fallthru
          _
        %v583 = vld [vmem:[#allocation5] sm:$0xff]
        %v584 = vld [vmem:[#allocation5 + $0x8] sm:$0xff]
        %v585 = vld [vmem:[#allocation8] sm:$0x3]
        %v586 = vld [vmem:[#allocation14] sm:$0x1]
        %v587 = vld [vmem:[#allocation4] sm:$0x1]
        %v588 = vld [vmem:[#allocation15] sm:$0xff]
        %v589 = vld [vmem:[#allocation15 + $0x8] sm:$0xff]
        %v590 = vld [vmem:[#allocation15 + $0x10] sm:$0xff]
        %v591 = vld [vmem:[#allocation15 + $0x18] sm:$0xff]
        %v592 = vld [vmem:[#allocation17] sm:$0xff]
        %v593 = vld [vmem:[#allocation17 + $0x8] sm:$0xff]
        %v594 = vld [vmem:[#allocation18] sm:$0xff]
        %v595 = vld [vmem:[#allocation18 + $0x8] sm:$0xff]
        %v596 = vld [vmem:[#allocation18 + $0x10] sm:$0xff]
        %v597 = vld [vmem:[#allocation18 + $0x18] sm:$0xff]
        %v598 = vld [vmem:[#allocation20] sm:$0x1]
        %v599 = vld [vmem:[#allocation2] sm:$0x3]
        %v600 = vld [vmem:[#allocation3] sm:$0x3]
        %v602 = vlaneseq
        %v603 = vshrl.u32 %v602, 7
        %v604 = vsub.s32 0, %v603
        %v605 = vrot.slane %v586, %v604
        %v607 = vmul.f32 %v599, %v605
        %vm608 = vcmask 254976
        %v609 = vsel %vm608, %v607, 0.0
        %610 = vadd.xlane.f32.xlu0 %v609
        %v611 = vpop.xlane.xlu0 %610
        %v613 = vlaneseq
        %v614 = vshrl.u32 %v613, 7
        %v615 = vsub.s32 0, %v614
        %v616 = vrot.slane %v587, %v615
        %v618 = vadd.f32 %v611, %v616
        %620 = vset.pattern.permute.xlu0 0
        %621 = vperm.xlu0 %620, %v618
        %v622 = vpop.permute.xlu0 %621
        %v624 = vadd.f32 %v585, %v622
        %vm625 = vcmask 58368
        %v626 = vsel %vm625, %v624, -inf
        %627 = vmax.xlane.f32.xlu0 %v626
        %v628 = vpop.xlane.xlu0 %627
        %v629 = vsub.f32 %v624, %v628
        %v630 = vmul.f32 %v629, 1.442695
        %v631 = vpow.pop %v630
        %v632 = vsel %vm625, %v631, 0.0
        %633 = vadd.xlane.f32.xlu0 %v632
        %v634 = vpop.xlane.xlu0 %633
        %v635 = vrcp.pop %v634
        %v636 = vmul.f32 %v631, %v635
        %v637 = vlaneseq
        %v638 = vshrl.u32 %v637, 7
        %v639 = vsub.s32 0, %v638
        %v640 = vrot.slane %v636, %v639
        %642 = vbcast.lane.b32.xlu0 %v640, 256
        %v643 = vpop.permute.xlu0 %642
        %v644 = vlaneseq
        %v645 = vshrl.u32 %v644, 7
        %v646 = vsub.s32 1, %v645
        %v647 = vrot.slane %v636, %v646
        %649 = vbcast.lane.b32.xlu0 %v647, 256
        %v650 = vpop.permute.xlu0 %649
        %v651 = vmul.f32 %v643, %v583
        %v652 = vmul.f32 %v650, %v584
        %vm653 = vcmask 261120
        %v654 = vsel %vm653, %v651, 0.0
        %v655 = vrot.slane %v654, 4
        %v656 = vadd.f32 %v654, %v655
        %v657 = vrot.slane %v656, 2
        %v658 = vadd.f32 %v656, %v657
        %v659 = vrot.slane %v658, 1
        %v660 = vadd.f32 %v658, %v659
        %v661 = vsel %vm653, %v652, 0.0
        %v662 = vrot.slane %v661, 4
        %v663 = vadd.f32 %v661, %v662
        %v664 = vrot.slane %v663, 2
        %v665 = vadd.f32 %v663, %v664
        %v666 = vrot.slane %v665, 1
        %v667 = vadd.f32 %v665, %v666
        %v668 = vld [vmem:[%s504] sm:$0x3]
        %vm669 = vcmask 130048
        %v671 = vsel %vm669, %v668, 0
        %673 = vmatprep.subr.mxu0 0.0
        %674 = vmatpush1.msra.mxu0 %v592
        %675 = vmatprep.subr.mxu0 0.0
        %676 = vmatpush1.msra.mxu0 %v593
        %677 = vmatprep.subr.mxu0 0.0
        %678 = vmatpush1.msra.mxu0 0.0
        %679 = vmatprep.subr.mxu0 0.0
        %680 = vmatpush1.msra.mxu0 0.0
        %681 = vmatprep.subr.mxu0 0.0
        %682 = vmatpush1.msra.mxu0 0.0
        %683 = vmatprep.subr.mxu0 0.0
        %684 = vmatpush1.msra.mxu0 0.0
        %685 = vmatprep.subr.mxu0 0.0
        %686 = vmatpush1.msra.mxu0 0.0
        %687 = vmatprep.subr.mxu0 0.0
        %688 = vmatpush1.msra.mxu0 0.0
        %689 = vmatprep.subr.mxu0 0.0
        %690 = vmatpush1.msra.mxu0 0.0
        %691 = vmatprep.subr.mxu0 0.0
        %692 = vmatpush1.msra.mxu0 0.0
        %693 = vmatprep.subr.mxu0 0.0
        %694 = vmatpush1.msra.mxu0 0.0
        %695 = vmatprep.subr.mxu0 0.0
        %696 = vmatpush1.msra.mxu0 0.0
        %697 = vmatprep.subr.mxu0 0.0
        %698 = vmatpush1.msra.mxu0 0.0
        %699 = vmatprep.subr.mxu0 0.0
        %700 = vmatpush1.msra.mxu0 0.0
        %701 = vmatprep.subr.mxu0 0.0
        %702 = vmatpush1.msra.mxu0 0.0
        %703 = vmatprep.subr.mxu0 0.0
        %704 = vmatpush1.msra.mxu0 0.0
        %705 = vmatprep.subr.mxu0 0.0
        %706 = vmatpush1.msra.mxu0 0.0
        %707 = vmatprep.subr.mxu0 0.0
        %708 = vmatpush1.msra.mxu0 0.0
        %709 = vmatprep.subr.mxu0 0.0
        %710 = vmatpush1.msra.mxu0 0.0
        %711 = vmatprep.subr.mxu0 0.0
        %712 = vmatpush1.msra.mxu0 0.0
        %713 = vmatprep.subr.mxu0 0.0
        %714 = vmatpush1.msra.mxu0 0.0
        %715 = vmatprep.subr.mxu0 0.0
        %716 = vmatpush1.msra.mxu0 0.0
        %717 = vmatprep.subr.mxu0 0.0
        %718 = vmatpush1.msra.mxu0 0.0
        %719 = vmatprep.subr.mxu0 0.0
        %720 = vmatpush1.msra.mxu0 0.0
        %721 = vmatprep.subr.mxu0 0.0
        %722 = vmatpush1.msra.mxu0 0.0
        %723 = vmatprep.subr.mxu0 0.0
        %724 = vmatpush1.msra.mxu0 0.0
        %725 = vmatprep.subr.mxu0 0.0
        %726 = vmatpush1.msra.mxu0 0.0
        %727 = vmatprep.subr.mxu0 0.0
        %728 = vmatpush1.msra.mxu0 0.0
        %729 = vmatprep.subr.mxu0 0.0
        %730 = vmatpush1.msra.mxu0 0.0
        %731 = vmatprep.subr.mxu0 0.0
        %732 = vmatpush1.msra.mxu0 0.0
        %733 = vmatprep.subr.mxu0 0.0
        %734 = vmatpush1.msra.mxu0 0.0
        %735 = vmatprep.subr.mxu0 0.0
        %736 = vmatpush1.msra.mxu0 0.0
        %737 = vmatprep.mubr.f32.mxu0 0.0
        %738 = vmatmul.mubr.f32.gmra.mrb[0].mxu0 %v671
        %v739 = vpop.f32.mrb[0].mxu0
        %v740 = vadd.f32 0.0, %v739
        %v741 = vpop.f32.mrb[0].mxu0
        %742 = vdwg.mxu0
        %vm745 = vcmask 1041409
        %v746 = vsel %vm745, %v667, %v660
        %v747 = vsel %vm653, %v746, 0
        %749 = vmatprep.subr.mxu0 0.0
        %750 = vmatpush1.msra.mxu0 %v588
        %751 = vmatprep.subr.mxu0 0.0
        %752 = vmatpush1.msra.mxu0 %v589
        %753 = vmatprep.subr.mxu0 0.0
        %754 = vmatpush1.msra.mxu0 %v590
        %755 = vmatprep.subr.mxu0 0.0
        %756 = vmatpush1.msra.mxu0 %v591
        %757 = vmatprep.subr.mxu0 0.0
        %758 = vmatpush1.msra.mxu0 0.0
        %759 = vmatprep.subr.mxu0 0.0
        %760 = vmatpush1.msra.mxu0 0.0
        %761 = vmatprep.subr.mxu0 0.0
        %762 = vmatpush1.msra.mxu0 0.0
        %763 = vmatprep.subr.mxu0 0.0
        %764 = vmatpush1.msra.mxu0 0.0
        %765 = vmatprep.subr.mxu0 0.0
        %766 = vmatpush1.msra.mxu0 0.0
        %767 = vmatprep.subr.mxu0 0.0
        %768 = vmatpush1.msra.mxu0 0.0
        %769 = vmatprep.subr.mxu0 0.0
        %770 = vmatpush1.msra.mxu0 0.0
        %771 = vmatprep.subr.mxu0 0.0
        %772 = vmatpush1.msra.mxu0 0.0
        %773 = vmatprep.subr.mxu0 0.0
        %774 = vmatpush1.msra.mxu0 0.0
        %775 = vmatprep.subr.mxu0 0.0
        %776 = vmatpush1.msra.mxu0 0.0
        %777 = vmatprep.subr.mxu0 0.0
        %778 = vmatpush1.msra.mxu0 0.0
        %779 = vmatprep.subr.mxu0 0.0
        %780 = vmatpush1.msra.mxu0 0.0
        %781 = vmatprep.subr.mxu0 0.0
        %782 = vmatpush1.msra.mxu0 0.0
        %783 = vmatprep.subr.mxu0 0.0
        %784 = vmatpush1.msra.mxu0 0.0
        %785 = vmatprep.subr.mxu0 0.0
        %786 = vmatpush1.msra.mxu0 0.0
        %787 = vmatprep.subr.mxu0 0.0
        %788 = vmatpush1.msra.mxu0 0.0
        %789 = vmatprep.subr.mxu0 0.0
        %790 = vmatpush1.msra.mxu0 0.0
        %791 = vmatprep.subr.mxu0 0.0
        %792 = vmatpush1.msra.mxu0 0.0
        %793 = vmatprep.subr.mxu0 0.0
        %794 = vmatpush1.msra.mxu0 0.0
        %795 = vmatprep.subr.mxu0 0.0
        %796 = vmatpush1.msra.mxu0 0.0
        %797 = vmatprep.subr.mxu0 0.0
        %798 = vmatpush1.msra.mxu0 0.0
        %799 = vmatprep.subr.mxu0 0.0
        %800 = vmatpush1.msra.mxu0 0.0
        %801 = vmatprep.subr.mxu0 0.0
        %802 = vmatpush1.msra.mxu0 0.0
        %803 = vmatprep.subr.mxu0 0.0
        %804 = vmatpush1.msra.mxu0 0.0
        %805 = vmatprep.subr.mxu0 0.0
        %806 = vmatpush1.msra.mxu0 0.0
        %807 = vmatprep.subr.mxu0 0.0
        %808 = vmatpush1.msra.mxu0 0.0
        %809 = vmatprep.subr.mxu0 0.0
        %810 = vmatpush1.msra.mxu0 0.0
        %811 = vmatprep.subr.mxu0 0.0
        %812 = vmatpush1.msra.mxu0 0.0
        %813 = vmatprep.mubr.f32.mxu0 0.0
        %814 = vmatmul.mubr.f32.gmra.mrb[0].mxu0 %v747
        %v815 = vpop.f32.mrb[0].mxu0
        %v816 = vadd.f32 %v740, %v815
        %v817 = vpop.f32.mrb[0].mxu0
        %818 = vdwg.mxu0
        %v820 = vsel %vm653, %v599, 0
        %822 = vmatprep.subr.mxu0 0.0
        %823 = vmatpush1.msra.mxu0 %v594
        %824 = vmatprep.subr.mxu0 0.0
        %825 = vmatpush1.msra.mxu0 %v595
        %826 = vmatprep.subr.mxu0 0.0
        %827 = vmatpush1.msra.mxu0 %v596
        %828 = vmatprep.subr.mxu0 0.0
        %829 = vmatpush1.msra.mxu0 %v597
        %830 = vmatprep.subr.mxu0 0.0
        %831 = vmatpush1.msra.mxu0 0.0
        %832 = vmatprep.subr.mxu0 0.0
        %833 = vmatpush1.msra.mxu0 0.0
        %834 = vmatprep.subr.mxu0 0.0
        %835 = vmatpush1.msra.mxu0 0.0
        %836 = vmatprep.subr.mxu0 0.0
        %837 = vmatpush1.msra.mxu0 0.0
        %838 = vmatprep.subr.mxu0 0.0
        %839 = vmatpush1.msra.mxu0 0.0
        %840 = vmatprep.subr.mxu0 0.0
        %841 = vmatpush1.msra.mxu0 0.0
        %842 = vmatprep.subr.mxu0 0.0
        %843 = vmatpush1.msra.mxu0 0.0
        %844 = vmatprep.subr.mxu0 0.0
        %845 = vmatpush1.msra.mxu0 0.0
        %846 = vmatprep.subr.mxu0 0.0
        %847 = vmatpush1.msra.mxu0 0.0
        %848 = vmatprep.subr.mxu0 0.0
        %849 = vmatpush1.msra.mxu0 0.0
        %850 = vmatprep.subr.mxu0 0.0
        %851 = vmatpush1.msra.mxu0 0.0
        %852 = vmatprep.subr.mxu0 0.0
        %853 = vmatpush1.msra.mxu0 0.0
        %854 = vmatprep.subr.mxu0 0.0
        %855 = vmatpush1.msra.mxu0 0.0
        %856 = vmatprep.subr.mxu0 0.0
        %857 = vmatpush1.msra.mxu0 0.0
        %858 = vmatprep.subr.mxu0 0.0
        %859 = vmatpush1.msra.mxu0 0.0
        %860 = vmatprep.subr.mxu0 0.0
        %861 = vmatpush1.msra.mxu0 0.0
        %862 = vmatprep.subr.mxu0 0.0
        %863 = vmatpush1.msra.mxu0 0.0
        %864 = vmatprep.subr.mxu0 0.0
        %865 = vmatpush1.msra.mxu0 0.0
        %866 = vmatprep.subr.mxu0 0.0
        %867 = vmatpush1.msra.mxu0 0.0
        %868 = vmatprep.subr.mxu0 0.0
        %869 = vmatpush1.msra.mxu0 0.0
        %870 = vmatprep.subr.mxu0 0.0
        %871 = vmatpush1.msra.mxu0 0.0
        %872 = vmatprep.subr.mxu0 0.0
        %873 = vmatpush1.msra.mxu0 0.0
        %874 = vmatprep.subr.mxu0 0.0
        %875 = vmatpush1.msra.mxu0 0.0
        %876 = vmatprep.subr.mxu0 0.0
        %877 = vmatpush1.msra.mxu0 0.0
        %878 = vmatprep.subr.mxu0 0.0
        %879 = vmatpush1.msra.mxu0 0.0
        %880 = vmatprep.subr.mxu0 0.0
        %881 = vmatpush1.msra.mxu0 0.0
        %882 = vmatprep.subr.mxu0 0.0
        %883 = vmatpush1.msra.mxu0 0.0
        %884 = vmatprep.subr.mxu0 0.0
        %885 = vmatpush1.msra.mxu0 0.0
        %886 = vmatprep.mubr.f32.mxu0 0.0
        %887 = vmatmul.mubr.f32.gmra.mrb[0].mxu0 %v820
        %v888 = vpop.f32.mrb[0].mxu0
        %v889 = vadd.f32 0.0, %v888
        %v890 = vpop.f32.mrb[0].mxu0
        %891 = vdwg.mxu0
        %v892 = vadd.f32 %v816, %v889
        %v894 = vlaneseq
        %v895 = vshrl.u32 %v894, 7
        %v896 = vsub.s32 0, %v895
        %v897 = vrot.slane %v598, %v896
        %v899 = vadd.f32 %v892, %v897
        %v900 = vxor.u32 %v899, 2147483648
        %v901 = vmul.f32 %v900, 1.442695
        %v902 = vpow.pop %v901
        %v903 = vadd.f32 %v902, 1.0
        %v904 = vrcp.pop %v903
        %v905 = vmul.f32 1.0, %v904
        %v906 = vtanh.pop %v899
        %908 = vrot.lane.b32.xlu0 %v600, 32
        %v909 = vpop.permute.xlu0 %908
        %v911 = vmul.f32 %v905, %v909
        %913 = vrot.lane.b32.xlu0 %v906, 64
        %v914 = vpop.permute.xlu0 %913
        %v916 = vmul.f32 %v905, %v914
        %918 = vrot.lane.b32.xlu0 %v916, 32
        %v919 = vpop.permute.xlu0 %918
        %v921 = vadd.f32 %v911, %v919
        %v922 = vtanh.pop %v921
        %924 = vrot.lane.b32.xlu0 %v922, 64
        %v925 = vpop.permute.xlu0 %924
        %v927 = vmul.f32 %v905, %v925
        %929 = vrot.lane.b32.xlu0 %v927, 32
        %v930 = vpop.permute.xlu0 %929
        %932 = vst.msk [vmem:[#allocation2] sm:$0x3] %vm608, %v930
        %934 = vrot.lane.b32.xlu0 %v921, 96
        %v935 = vpop.permute.xlu0 %934
        %937 = vst.msk [vmem:[#allocation3] sm:$0x3] %vm608, %v935
        %938 = vst.msk [vmem:[%s570] sm:$0x3] %vm608, %v930
        %v939 = vld [vmem:[#allocation2] sm:$0x3]
        %v940 = vld [vmem:[#allocation3] sm:$0x3]
        %v941 = vmul.f32 %v939, %v605
        %v942 = vsel %vm608, %v941, 0.0
        %943 = vadd.xlane.f32.xlu0 %v942
        %v944 = vpop.xlane.xlu0 %943
        %v945 = vadd.f32 %v944, %v616
        %947 = vset.pattern.permute.xlu0 0
        %948 = vperm.xlu0 %947, %v945
        %v949 = vpop.permute.xlu0 %948
        %v951 = vadd.f32 %v585, %v949
        %v952 = vsel %vm625, %v951, -inf
        %953 = vmax.xlane.f32.xlu0 %v952
        %v954 = vpop.xlane.xlu0 %953
        %v955 = vsub.f32 %v951, %v954
        %v956 = vmul.f32 %v955, 1.442695
        %v957 = vpow.pop %v956
        %v958 = vsel %vm625, %v957, 0.0
        %959 = vadd.xlane.f32.xlu0 %v958
        %v960 = vpop.xlane.xlu0 %959
        %v961 = vrcp.pop %v960
        %v962 = vmul.f32 %v957, %v961
        %v963 = vlaneseq
        %v964 = vshrl.u32 %v963, 7
        %v965 = vsub.s32 0, %v964
        %v966 = vrot.slane %v962, %v965
        %968 = vbcast.lane.b32.xlu0 %v966, 256
        %v969 = vpop.permute.xlu0 %968
        %v970 = vlaneseq
        %v971 = vshrl.u32 %v970, 7
        %v972 = vsub.s32 1, %v971
        %v973 = vrot.slane %v962, %v972
        %975 = vbcast.lane.b32.xlu0 %v973, 256
        %v976 = vpop.permute.xlu0 %975
        %v977 = vmul.f32 %v969, %v583
        %v978 = vmul.f32 %v976, %v584
        %v979 = vsel %vm653, %v977, 0.0
        %v980 = vrot.slane %v979, 4
        %v981 = vadd.f32 %v979, %v980
        %v982 = vrot.slane %v981, 2
        %v983 = vadd.f32 %v981, %v982
        %v984 = vrot.slane %v983, 1
        %v985 = vadd.f32 %v983, %v984
        %v986 = vsel %vm653, %v978, 0.0
        %v987 = vrot.slane %v986, 4
        %v988 = vadd.f32 %v986, %v987
        %v989 = vrot.slane %v988, 2
        %v990 = vadd.f32 %v988, %v989
        %v991 = vrot.slane %v990, 1
        %v992 = vadd.f32 %v990, %v991
        %s993 = scalar_lea.vmem %s504, 2 [#allocation10]
        %v994 = vld [vmem:[%s993] sm:$0x3]
        %v996 = vsel %vm669, %v994, 0
        %998 = vmatprep.subr.mxu0 0.0
        %999 = vmatpush1.msra.mxu0 %v592
        %1000 = vmatprep.subr.mxu0 0.0
        %1001 = vmatpush1.msra.mxu0 %v593
        %1002 = vmatprep.subr.mxu0 0.0
        %1003 = vmatpush1.msra.mxu0 0.0
        %1004 = vmatprep.subr.mxu0 0.0
        %1005 = vmatpush1.msra.mxu0 0.0
        %1006 = vmatprep.subr.mxu0 0.0
        %1007 = vmatpush1.msra.mxu0 0.0
        %1008 = vmatprep.subr.mxu0 0.0
        %1009 = vmatpush1.msra.mxu0 0.0
        %1010 = vmatprep.subr.mxu0 0.0
        %1011 = vmatpush1.msra.mxu0 0.0
        %1012 = vmatprep.subr.mxu0 0.0
        %1013 = vmatpush1.msra.mxu0 0.0
        %1014 = vmatprep.subr.mxu0 0.0
        %1015 = vmatpush1.msra.mxu0 0.0
        %1016 = vmatprep.subr.mxu0 0.0
        %1017 = vmatpush1.msra.mxu0 0.0
        %1018 = vmatprep.subr.mxu0 0.0
        %1019 = vmatpush1.msra.mxu0 0.0
        %1020 = vmatprep.subr.mxu0 0.0
        %1021 = vmatpush1.msra.mxu0 0.0
        %1022 = vmatprep.subr.mxu0 0.0
        %1023 = vmatpush1.msra.mxu0 0.0
        %1024 = vmatprep.subr.mxu0 0.0
        %1025 = vmatpush1.msra.mxu0 0.0
        %1026 = vmatprep.subr.mxu0 0.0
        %1027 = vmatpush1.msra.mxu0 0.0
        %1028 = vmatprep.subr.mxu0 0.0
        %1029 = vmatpush1.msra.mxu0 0.0
        %1030 = vmatprep.subr.mxu0 0.0
        %1031 = vmatpush1.msra.mxu0 0.0
        %1032 = vmatprep.subr.mxu0 0.0
        %1033 = vmatpush1.msra.mxu0 0.0
        %1034 = vmatprep.subr.mxu0 0.0
        %1035 = vmatpush1.msra.mxu0 0.0
        %1036 = vmatprep.subr.mxu0 0.0
        %1037 = vmatpush1.msra.mxu0 0.0
        %1038 = vmatprep.subr.mxu0 0.0
        %1039 = vmatpush1.msra.mxu0 0.0
        %1040 = vmatprep.subr.mxu0 0.0
        %1041 = vmatpush1.msra.mxu0 0.0
        %1042 = vmatprep.subr.mxu0 0.0
        %1043 = vmatpush1.msra.mxu0 0.0
        %1044 = vmatprep.subr.mxu0 0.0
        %1045 = vmatpush1.msra.mxu0 0.0
        %1046 = vmatprep.subr.mxu0 0.0
        %1047 = vmatpush1.msra.mxu0 0.0
        %1048 = vmatprep.subr.mxu0 0.0
        %1049 = vmatpush1.msra.mxu0 0.0
        %1050 = vmatprep.subr.mxu0 0.0
        %1051 = vmatpush1.msra.mxu0 0.0
        %1052 = vmatprep.subr.mxu0 0.0
        %1053 = vmatpush1.msra.mxu0 0.0
        %1054 = vmatprep.subr.mxu0 0.0
        %1055 = vmatpush1.msra.mxu0 0.0
        %1056 = vmatprep.subr.mxu0 0.0
        %1057 = vmatpush1.msra.mxu0 0.0
        %1058 = vmatprep.subr.mxu0 0.0
        %1059 = vmatpush1.msra.mxu0 0.0
        %1060 = vmatprep.subr.mxu0 0.0
        %1061 = vmatpush1.msra.mxu0 0.0
        %1062 = vmatprep.mubr.f32.mxu0 0.0
        %1063 = vmatmul.mubr.f32.gmra.mrb[0].mxu0 %v996
        %v1064 = vpop.f32.mrb[0].mxu0
        %v1065 = vadd.f32 0.0, %v1064
        %v1066 = vpop.f32.mrb[0].mxu0
        %1067 = vdwg.mxu0
        %v1070 = vsel %vm745, %v992, %v985
        %v1071 = vsel %vm653, %v1070, 0
        %1073 = vmatprep.subr.mxu0 0.0
        %1074 = vmatpush1.msra.mxu0 %v588
        %1075 = vmatprep.subr.mxu0 0.0
        %1076 = vmatpush1.msra.mxu0 %v589
        %1077 = vmatprep.subr.mxu0 0.0
        %1078 = vmatpush1.msra.mxu0 %v590
        %1079 = vmatprep.subr.mxu0 0.0
        %1080 = vmatpush1.msra.mxu0 %v591
        %1081 = vmatprep.subr.mxu0 0.0
        %1082 = vmatpush1.msra.mxu0 0.0
        %1083 = vmatprep.subr.mxu0 0.0
        %1084 = vmatpush1.msra.mxu0 0.0
        %1085 = vmatprep.subr.mxu0 0.0
        %1086 = vmatpush1.msra.mxu0 0.0
        %1087 = vmatprep.subr.mxu0 0.0
        %1088 = vmatpush1.msra.mxu0 0.0
        %1089 = vmatprep.subr.mxu0 0.0
        %1090 = vmatpush1.msra.mxu0 0.0
        %1091 = vmatprep.subr.mxu0 0.0
        %1092 = vmatpush1.msra.mxu0 0.0
        %1093 = vmatprep.subr.mxu0 0.0
        %1094 = vmatpush1.msra.mxu0 0.0
        %1095 = vmatprep.subr.mxu0 0.0
        %1096 = vmatpush1.msra.mxu0 0.0
        %1097 = vmatprep.subr.mxu0 0.0
        %1098 = vmatpush1.msra.mxu0 0.0
        %1099 = vmatprep.subr.mxu0 0.0
        %1100 = vmatpush1.msra.mxu0 0.0
        %1101 = vmatprep.subr.mxu0 0.0
        %1102 = vmatpush1.msra.mxu0 0.0
        %1103 = vmatprep.subr.mxu0 0.0
        %1104 = vmatpush1.msra.mxu0 0.0
        %1105 = vmatprep.subr.mxu0 0.0
        %1106 = vmatpush1.msra.mxu0 0.0
        %1107 = vmatprep.subr.mxu0 0.0
        %1108 = vmatpush1.msra.mxu0 0.0
        %1109 = vmatprep.subr.mxu0 0.0
        %1110 = vmatpush1.msra.mxu0 0.0
        %1111 = vmatprep.subr.mxu0 0.0
        %1112 = vmatpush1.msra.mxu0 0.0
        %1113 = vmatprep.subr.mxu0 0.0
        %1114 = vmatpush1.msra.mxu0 0.0
        %1115 = vmatprep.subr.mxu0 0.0
        %1116 = vmatpush1.msra.mxu0 0.0
        %1117 = vmatprep.subr.mxu0 0.0
        %1118 = vmatpush1.msra.mxu0 0.0
        %1119 = vmatprep.subr.mxu0 0.0
        %1120 = vmatpush1.msra.mxu0 0.0
        %1121 = vmatprep.subr.mxu0 0.0
        %1122 = vmatpush1.msra.mxu0 0.0
        %1123 = vmatprep.subr.mxu0 0.0
        %1124 = vmatpush1.msra.mxu0 0.0
        %1125 = vmatprep.subr.mxu0 0.0
        %1126 = vmatpush1.msra.mxu0 0.0
        %1127 = vmatprep.subr.mxu0 0.0
        %1128 = vmatpush1.msra.mxu0 0.0
        %1129 = vmatprep.subr.mxu0 0.0
        %1130 = vmatpush1.msra.mxu0 0.0
        %1131 = vmatprep.subr.mxu0 0.0
        %1132 = vmatpush1.msra.mxu0 0.0
        %1133 = vmatprep.subr.mxu0 0.0
        %1134 = vmatpush1.msra.mxu0 0.0
        %1135 = vmatprep.subr.mxu0 0.0
        %1136 = vmatpush1.msra.mxu0 0.0
        %1137 = vmatprep.mubr.f32.mxu0 0.0
        %1138 = vmatmul.mubr.f32.gmra.mrb[0].mxu0 %v1071
        %v1139 = vpop.f32.mrb[0].mxu0
        %v1140 = vadd.f32 %v1065, %v1139
        %v1141 = vpop.f32.mrb[0].mxu0
        %1142 = vdwg.mxu0
        %v1144 = vsel %vm653, %v939, 0
        %1146 = vmatprep.subr.mxu0 0.0
        %1147 = vmatpush1.msra.mxu0 %v594
        %1148 = vmatprep.subr.mxu0 0.0
        %1149 = vmatpush1.msra.mxu0 %v595
        %1150 = vmatprep.subr.mxu0 0.0
        %1151 = vmatpush1.msra.mxu0 %v596
        %1152 = vmatprep.subr.mxu0 0.0
        %1153 = vmatpush1.msra.mxu0 %v597
        %1154 = vmatprep.subr.mxu0 0.0
        %1155 = vmatpush1.msra.mxu0 0.0
        %1156 = vmatprep.subr.mxu0 0.0
        %1157 = vmatpush1.msra.mxu0 0.0
        %1158 = vmatprep.subr.mxu0 0.0
        %1159 = vmatpush1.msra.mxu0 0.0
        %1160 = vmatprep.subr.mxu0 0.0
        %1161 = vmatpush1.msra.mxu0 0.0
        %1162 = vmatprep.subr.mxu0 0.0
        %1163 = vmatpush1.msra.mxu0 0.0
        %1164 = vmatprep.subr.mxu0 0.0
        %1165 = vmatpush1.msra.mxu0 0.0
        %1166 = vmatprep.subr.mxu0 0.0
        %1167 = vmatpush1.msra.mxu0 0.0
        %1168 = vmatprep.subr.mxu0 0.0
        %1169 = vmatpush1.msra.mxu0 0.0
        %1170 = vmatprep.subr.mxu0 0.0
        %1171 = vmatpush1.msra.mxu0 0.0
        %1172 = vmatprep.subr.mxu0 0.0
        %1173 = vmatpush1.msra.mxu0 0.0
        %1174 = vmatprep.subr.mxu0 0.0
        %1175 = vmatpush1.msra.mxu0 0.0
        %1176 = vmatprep.subr.mxu0 0.0
        %1177 = vmatpush1.msra.mxu0 0.0
        %1178 = vmatprep.subr.mxu0 0.0
        %1179 = vmatpush1.msra.mxu0 0.0
        %1180 = vmatprep.subr.mxu0 0.0
        %1181 = vmatpush1.msra.mxu0 0.0
        %1182 = vmatprep.subr.mxu0 0.0
        %1183 = vmatpush1.msra.mxu0 0.0
        %1184 = vmatprep.subr.mxu0 0.0
        %1185 = vmatpush1.msra.mxu0 0.0
        %1186 = vmatprep.subr.mxu0 0.0
        %1187 = vmatpush1.msra.mxu0 0.0
        %1188 = vmatprep.subr.mxu0 0.0
        %1189 = vmatpush1.msra.mxu0 0.0
        %1190 = vmatprep.subr.mxu0 0.0
        %1191 = vmatpush1.msra.mxu0 0.0
        %1192 = vmatprep.subr.mxu0 0.0
        %1193 = vmatpush1.msra.mxu0 0.0
        %1194 = vmatprep.subr.mxu0 0.0
        %1195 = vmatpush1.msra.mxu0 0.0
        %1196 = vmatprep.subr.mxu0 0.0
        %1197 = vmatpush1.msra.mxu0 0.0
        %1198 = vmatprep.subr.mxu0 0.0
        %1199 = vmatpush1.msra.mxu0 0.0
        %1200 = vmatprep.subr.mxu0 0.0
        %1201 = vmatpush1.msra.mxu0 0.0
        %1202 = vmatprep.subr.mxu0 0.0
        %1203 = vmatpush1.msra.mxu0 0.0
        %1204 = vmatprep.subr.mxu0 0.0
        %1205 = vmatpush1.msra.mxu0 0.0
        %1206 = vmatprep.subr.mxu0 0.0
        %1207 = vmatpush1.msra.mxu0 0.0
        %1208 = vmatprep.subr.mxu0 0.0
        %1209 = vmatpush1.msra.mxu0 0.0
        %1210 = vmatprep.mubr.f32.mxu0 0.0
        %1211 = vmatmul.mubr.f32.gmra.mrb[0].mxu0 %v1144
        %v1212 = vpop.f32.mrb[0].mxu0
        %v1213 = vadd.f32 0.0, %v1212
        %v1214 = vpop.f32.mrb[0].mxu0
        %1215 = vdwg.mxu0
        %v1216 = vadd.f32 %v1140, %v1213
        %v1217 = vadd.f32 %v1216, %v897
        %v1218 = vxor.u32 %v1217, 2147483648
        %v1219 = vmul.f32 %v1218, 1.442695
        %v1220 = vpow.pop %v1219
        %v1221 = vadd.f32 %v1220, 1.0
        %v1222 = vrcp.pop %v1221
        %v1223 = vmul.f32 1.0, %v1222
        %v1224 = vtanh.pop %v1217
        %1226 = vrot.lane.b32.xlu0 %v940, 32
        %v1227 = vpop.permute.xlu0 %1226
        %v1229 = vmul.f32 %v1223, %v1227
        %1231 = vrot.lane.b32.xlu0 %v1224, 64
        %v1232 = vpop.permute.xlu0 %1231
        %v1234 = vmul.f32 %v1223, %v1232
        %1236 = vrot.lane.b32.xlu0 %v1234, 32
        %v1237 = vpop.permute.xlu0 %1236
        %v1239 = vadd.f32 %v1229, %v1237
        %v1240 = vtanh.pop %v1239
        %1242 = vrot.lane.b32.xlu0 %v1240, 64
        %v1243 = vpop.permute.xlu0 %1242
        %v1245 = vmul.f32 %v1223, %v1243
        %1247 = vrot.lane.b32.xlu0 %v1245, 32
        %v1248 = vpop.permute.xlu0 %1247
        %1250 = vst.msk [vmem:[#allocation2] sm:$0x3] %vm608, %v1248
        %1252 = vrot.lane.b32.xlu0 %v1239, 96
        %v1253 = vpop.permute.xlu0 %1252
        %1255 = vst.msk [vmem:[#allocation3] sm:$0x3] %vm608, %v1253
        %s1256 = scalar_lea.vmem %s570, 2 [#allocation21]
        %1257 = vst.msk [vmem:[%s1256] sm:$0x3] %vm608, %v1248
        %v1258 = vld [vmem:[#allocation2] sm:$0x3]
        %v1259 = vld [vmem:[#allocation3] sm:$0x3]
        %v1260 = vmul.f32 %v1258, %v605
        %v1261 = vsel %vm608, %v1260, 0.0
        %1262 = vadd.xlane.f32.xlu0 %v1261
        %v1263 = vpop.xlane.xlu0 %1262
        %v1264 = vadd.f32 %v1263, %v616
        %1266 = vset.pattern.permute.xlu0 0
        %1267 = vperm.xlu0 %1266, %v1264
        %v1268 = vpop.permute.xlu0 %1267
        %v1270 = vadd.f32 %v585, %v1268
        %v1271 = vsel %vm625, %v1270, -inf
        %1272 = vmax.xlane.f32.xlu0 %v1271
        %v1273 = vpop.xlane.xlu0 %1272
        %v1274 = vsub.f32 %v1270, %v1273
        %v1275 = vmul.f32 %v1274, 1.442695
        %v1276 = vpow.pop %v1275
        %v1277 = vsel %vm625, %v1276, 0.0
        %1278 = vadd.xlane.f32.xlu0 %v1277
        %v1279 = vpop.xlane.xlu0 %1278
        %v1280 = vrcp.pop %v1279
        %v1281 = vmul.f32 %v1276, %v1280
        %v1282 = vlaneseq
        %v1283 = vshrl.u32 %v1282, 7
        %v1284 = vsub.s32 0, %v1283
        %v1285 = vrot.slane %v1281, %v1284
        %1287 = vbcast.lane.b32.xlu0 %v1285, 256
        %v1288 = vpop.permute.xlu0 %1287
        %v1289 = vlaneseq
        %v1290 = vshrl.u32 %v1289, 7
        %v1291 = vsub.s32 1, %v1290
        %v1292 = vrot.slane %v1281, %v1291
        %1294 = vbcast.lane.b32.xlu0 %v1292, 256
        %v1295 = vpop.permute.xlu0 %1294
        %v1296 = vmul.f32 %v1288, %v583
        %v1297 = vmul.f32 %v1295, %v584
        %v1298 = vsel %vm653, %v1296, 0.0
        %v1299 = vrot.slane %v1298, 4
        %v1300 = vadd.f32 %v1298, %v1299
        %v1301 = vrot.slane %v1300, 2
        %v1302 = vadd.f32 %v1300, %v1301
        %v1303 = vrot.slane %v1302, 1
        %v1304 = vadd.f32 %v1302, %v1303
        %v1305 = vsel %vm653, %v1297, 0.0
        %v1306 = vrot.slane %v1305, 4
        %v1307 = vadd.f32 %v1305, %v1306
        %v1308 = vrot.slane %v1307, 2
        %v1309 = vadd.f32 %v1307, %v1308
        %v1310 = vrot.slane %v1309, 1
        %v1311 = vadd.f32 %v1309, %v1310
        %s1312 = scalar_lea.vmem %s504, 4 [#allocation10]
        %v1313 = vld [vmem:[%s1312] sm:$0x3]
        %v1315 = vsel %vm669, %v1313, 0
        %1317 = vmatprep.subr.mxu0 0.0
        %1318 = vmatpush1.msra.mxu0 %v592
        %1319 = vmatprep.subr.mxu0 0.0
        %1320 = vmatpush1.msra.mxu0 %v593
        %1321 = vmatprep.subr.mxu0 0.0
        %1322 = vmatpush1.msra.mxu0 0.0
        %1323 = vmatprep.subr.mxu0 0.0
        %1324 = vmatpush1.msra.mxu0 0.0
        %1325 = vmatprep.subr.mxu0 0.0
        %1326 = vmatpush1.msra.mxu0 0.0
        %1327 = vmatprep.subr.mxu0 0.0
        %1328 = vmatpush1.msra.mxu0 0.0
        %1329 = vmatprep.subr.mxu0 0.0
        %1330 = vmatpush1.msra.mxu0 0.0
        %1331 = vmatprep.subr.mxu0 0.0
        %1332 = vmatpush1.msra.mxu0 0.0
        %1333 = vmatprep.subr.mxu0 0.0
        %1334 = vmatpush1.msra.mxu0 0.0
        %1335 = vmatprep.subr.mxu0 0.0
        %1336 = vmatpush1.msra.mxu0 0.0
        %1337 = vmatprep.subr.mxu0 0.0
        %1338 = vmatpush1.msra.mxu0 0.0
        %1339 = vmatprep.subr.mxu0 0.0
        %1340 = vmatpush1.msra.mxu0 0.0
        %1341 = vmatprep.subr.mxu0 0.0
        %1342 = vmatpush1.msra.mxu0 0.0
        %1343 = vmatprep.subr.mxu0 0.0
        %1344 = vmatpush1.msra.mxu0 0.0
        %1345 = vmatprep.subr.mxu0 0.0
        %1346 = vmatpush1.msra.mxu0 0.0
        %1347 = vmatprep.subr.mxu0 0.0
        %1348 = vmatpush1.msra.mxu0 0.0
        %1349 = vmatprep.subr.mxu0 0.0
        %1350 = vmatpush1.msra.mxu0 0.0
        %1351 = vmatprep.subr.mxu0 0.0
        %1352 = vmatpush1.msra.mxu0 0.0
        %1353 = vmatprep.subr.mxu0 0.0
        %1354 = vmatpush1.msra.mxu0 0.0
        %1355 = vmatprep.subr.mxu0 0.0
        %1356 = vmatpush1.msra.mxu0 0.0
        %1357 = vmatprep.subr.mxu0 0.0
        %1358 = vmatpush1.msra.mxu0 0.0
        %1359 = vmatprep.subr.mxu0 0.0
        %1360 = vmatpush1.msra.mxu0 0.0
        %1361 = vmatprep.subr.mxu0 0.0
        %1362 = vmatpush1.msra.mxu0 0.0
        %1363 = vmatprep.subr.mxu0 0.0
        %1364 = vmatpush1.msra.mxu0 0.0
        %1365 = vmatprep.subr.mxu0 0.0
        %1366 = vmatpush1.msra.mxu0 0.0
        %1367 = vmatprep.subr.mxu0 0.0
        %1368 = vmatpush1.msra.mxu0 0.0
        %1369 = vmatprep.subr.mxu0 0.0
        %1370 = vmatpush1.msra.mxu0 0.0
        %1371 = vmatprep.subr.mxu0 0.0
        %1372 = vmatpush1.msra.mxu0 0.0
        %1373 = vmatprep.subr.mxu0 0.0
        %1374 = vmatpush1.msra.mxu0 0.0
        %1375 = vmatprep.subr.mxu0 0.0
        %1376 = vmatpush1.msra.mxu0 0.0
        %1377 = vmatprep.subr.mxu0 0.0
        %1378 = vmatpush1.msra.mxu0 0.0
        %1379 = vmatprep.subr.mxu0 0.0
        %1380 = vmatpush1.msra.mxu0 0.0
        %1381 = vmatprep.mubr.f32.mxu0 0.0
        %1382 = vmatmul.mubr.f32.gmra.mrb[0].mxu0 %v1315
        %v1383 = vpop.f32.mrb[0].mxu0
        %v1384 = vadd.f32 0.0, %v1383
        %v1385 = vpop.f32.mrb[0].mxu0
        %1386 = vdwg.mxu0
        %v1389 = vsel %vm745, %v1311, %v1304
        %v1390 = vsel %vm653, %v1389, 0
        %1392 = vmatprep.subr.mxu0 0.0
        %1393 = vmatpush1.msra.mxu0 %v588
        %1394 = vmatprep.subr.mxu0 0.0
        %1395 = vmatpush1.msra.mxu0 %v589
        %1396 = vmatprep.subr.mxu0 0.0
        %1397 = vmatpush1.msra.mxu0 %v590
        %1398 = vmatprep.subr.mxu0 0.0
        %1399 = vmatpush1.msra.mxu0 %v591
        %1400 = vmatprep.subr.mxu0 0.0
        %1401 = vmatpush1.msra.mxu0 0.0
        %1402 = vmatprep.subr.mxu0 0.0
        %1403 = vmatpush1.msra.mxu0 0.0
        %1404 = vmatprep.subr.mxu0 0.0
        %1405 = vmatpush1.msra.mxu0 0.0
        %1406 = vmatprep.subr.mxu0 0.0
        %1407 = vmatpush1.msra.mxu0 0.0
        %1408 = vmatprep.subr.mxu0 0.0
        %1409 = vmatpush1.msra.mxu0 0.0
        %1410 = vmatprep.subr.mxu0 0.0
        %1411 = vmatpush1.msra.mxu0 0.0
        %1412 = vmatprep.subr.mxu0 0.0
        %1413 = vmatpush1.msra.mxu0 0.0
        %1414 = vmatprep.subr.mxu0 0.0
        %1415 = vmatpush1.msra.mxu0 0.0
        %1416 = vmatprep.subr.mxu0 0.0
        %1417 = vmatpush1.msra.mxu0 0.0
        %1418 = vmatprep.subr.mxu0 0.0
        %1419 = vmatpush1.msra.mxu0 0.0
        %1420 = vmatprep.subr.mxu0 0.0
        %1421 = vmatpush1.msra.mxu0 0.0
        %1422 = vmatprep.subr.mxu0 0.0
        %1423 = vmatpush1.msra.mxu0 0.0
        %1424 = vmatprep.subr.mxu0 0.0
        %1425 = vmatpush1.msra.mxu0 0.0
        %1426 = vmatprep.subr.mxu0 0.0
        %1427 = vmatpush1.msra.mxu0 0.0
        %1428 = vmatprep.subr.mxu0 0.0
        %1429 = vmatpush1.msra.mxu0 0.0
        %1430 = vmatprep.subr.mxu0 0.0
        %1431 = vmatpush1.msra.mxu0 0.0
        %1432 = vmatprep.subr.mxu0 0.0
        %1433 = vmatpush1.msra.mxu0 0.0
        %1434 = vmatprep.subr.mxu0 0.0
        %1435 = vmatpush1.msra.mxu0 0.0
        %1436 = vmatprep.subr.mxu0 0.0
        %1437 = vmatpush1.msra.mxu0 0.0
        %1438 = vmatprep.subr.mxu0 0.0
        %1439 = vmatpush1.msra.mxu0 0.0
        %1440 = vmatprep.subr.mxu0 0.0
        %1441 = vmatpush1.msra.mxu0 0.0
        %1442 = vmatprep.subr.mxu0 0.0
        %1443 = vmatpush1.msra.mxu0 0.0
        %1444 = vmatprep.subr.mxu0 0.0
        %1445 = vmatpush1.msra.mxu0 0.0
        %1446 = vmatprep.subr.mxu0 0.0
        %1447 = vmatpush1.msra.mxu0 0.0
        %1448 = vmatprep.subr.mxu0 0.0
        %1449 = vmatpush1.msra.mxu0 0.0
        %1450 = vmatprep.subr.mxu0 0.0
        %1451 = vmatpush1.msra.mxu0 0.0
        %1452 = vmatprep.subr.mxu0 0.0
        %1453 = vmatpush1.msra.mxu0 0.0
        %1454 = vmatprep.subr.mxu0 0.0
        %1455 = vmatpush1.msra.mxu0 0.0
        %1456 = vmatprep.mubr.f32.mxu0 0.0
        %1457 = vmatmul.mubr.f32.gmra.mrb[0].mxu0 %v1390
        %v1458 = vpop.f32.mrb[0].mxu0
        %v1459 = vadd.f32 %v1384, %v1458
        %v1460 = vpop.f32.mrb[0].mxu0
        %1461 = vdwg.mxu0
        %v1463 = vsel %vm653, %v1258, 0
        %1465 = vmatprep.subr.mxu0 0.0
        %1466 = vmatpush1.msra.mxu0 %v594
        %1467 = vmatprep.subr.mxu0 0.0
        %1468 = vmatpush1.msra.mxu0 %v595
        %1469 = vmatprep.subr.mxu0 0.0
        %1470 = vmatpush1.msra.mxu0 %v596
        %1471 = vmatprep.subr.mxu0 0.0
        %1472 = vmatpush1.msra.mxu0 %v597
        %1473 = vmatprep.subr.mxu0 0.0
        %1474 = vmatpush1.msra.mxu0 0.0
        %1475 = vmatprep.subr.mxu0 0.0
        %1476 = vmatpush1.msra.mxu0 0.0
        %1477 = vmatprep.subr.mxu0 0.0
        %1478 = vmatpush1.msra.mxu0 0.0
        %1479 = vmatprep.subr.mxu0 0.0
        %1480 = vmatpush1.msra.mxu0 0.0
        %1481 = vmatprep.subr.mxu0 0.0
        %1482 = vmatpush1.msra.mxu0 0.0
        %1483 = vmatprep.subr.mxu0 0.0
        %1484 = vmatpush1.msra.mxu0 0.0
        %1485 = vmatprep.subr.mxu0 0.0
        %1486 = vmatpush1.msra.mxu0 0.0
        %1487 = vmatprep.subr.mxu0 0.0
        %1488 = vmatpush1.msra.mxu0 0.0
        %1489 = vmatprep.subr.mxu0 0.0
        %1490 = vmatpush1.msra.mxu0 0.0
        %1491 = vmatprep.subr.mxu0 0.0
        %1492 = vmatpush1.msra.mxu0 0.0
        %1493 = vmatprep.subr.mxu0 0.0
        %1494 = vmatpush1.msra.mxu0 0.0
        %1495 = vmatprep.subr.mxu0 0.0
        %1496 = vmatpush1.msra.mxu0 0.0
        %1497 = vmatprep.subr.mxu0 0.0
        %1498 = vmatpush1.msra.mxu0 0.0
        %1499 = vmatprep.subr.mxu0 0.0
        %1500 = vmatpush1.msra.mxu0 0.0
        %1501 = vmatprep.subr.mxu0 0.0
        %1502 = vmatpush1.msra.mxu0 0.0
        %1503 = vmatprep.subr.mxu0 0.0
        %1504 = vmatpush1.msra.mxu0 0.0
        %1505 = vmatprep.subr.mxu0 0.0
        %1506 = vmatpush1.msra.mxu0 0.0
        %1507 = vmatprep.subr.mxu0 0.0
        %1508 = vmatpush1.msra.mxu0 0.0
        %1509 = vmatprep.subr.mxu0 0.0
        %1510 = vmatpush1.msra.mxu0 0.0
        %1511 = vmatprep.subr.mxu0 0.0
        %1512 = vmatpush1.msra.mxu0 0.0
        %1513 = vmatprep.subr.mxu0 0.0
        %1514 = vmatpush1.msra.mxu0 0.0
        %1515 = vmatprep.subr.mxu0 0.0
        %1516 = vmatpush1.msra.mxu0 0.0
        %1517 = vmatprep.subr.mxu0 0.0
        %1518 = vmatpush1.msra.mxu0 0.0
        %1519 = vmatprep.subr.mxu0 0.0
        %1520 = vmatpush1.msra.mxu0 0.0
        %1521 = vmatprep.subr.mxu0 0.0
        %1522 = vmatpush1.msra.mxu0 0.0
        %1523 = vmatprep.subr.mxu0 0.0
        %1524 = vmatpush1.msra.mxu0 0.0
        %1525 = vmatprep.subr.mxu0 0.0
        %1526 = vmatpush1.msra.mxu0 0.0
        %1527 = vmatprep.subr.mxu0 0.0
        %1528 = vmatpush1.msra.mxu0 0.0
        %1529 = vmatprep.mubr.f32.mxu0 0.0
        %1530 = vmatmul.mubr.f32.gmra.mrb[0].mxu0 %v1463
        %v1531 = vpop.f32.mrb[0].mxu0
        %v1532 = vadd.f32 0.0, %v1531
        %v1533 = vpop.f32.mrb[0].mxu0
        %1534 = vdwg.mxu0
        %v1535 = vadd.f32 %v1459, %v1532
        %v1536 = vadd.f32 %v1535, %v897
        %v1537 = vxor.u32 %v1536, 2147483648
        %v1538 = vmul.f32 %v1537, 1.442695
        %v1539 = vpow.pop %v1538
        %v1540 = vadd.f32 %v1539, 1.0
        %v1541 = vrcp.pop %v1540
        %v1542 = vmul.f32 1.0, %v1541
        %v1543 = vtanh.pop %v1536
        %1545 = vrot.lane.b32.xlu0 %v1259, 32
        %v1546 = vpop.permute.xlu0 %1545
        %v1548 = vmul.f32 %v1542, %v1546
        %1550 = vrot.lane.b32.xlu0 %v1543, 64
        %v1551 = vpop.permute.xlu0 %1550
        %v1553 = vmul.f32 %v1542, %v1551
        %1555 = vrot.lane.b32.xlu0 %v1553, 32
        %v1556 = vpop.permute.xlu0 %1555
        %v1558 = vadd.f32 %v1548, %v1556
        %v1559 = vtanh.pop %v1558
        %1561 = vrot.lane.b32.xlu0 %v1559, 64
        %v1562 = vpop.permute.xlu0 %1561
        %v1564 = vmul.f32 %v1542, %v1562
        %1566 = vrot.lane.b32.xlu0 %v1564, 32
        %v1567 = vpop.permute.xlu0 %1566
        %1569 = vst.msk [vmem:[#allocation2] sm:$0x3] %vm608, %v1567
        %1571 = vrot.lane.b32.xlu0 %v1558, 96
        %v1572 = vpop.permute.xlu0 %1571
        %1574 = vst.msk [vmem:[#allocation3] sm:$0x3] %vm608, %v1572
        %s1575 = scalar_lea.vmem %s570, 4 [#allocation21]
        %1576 = vst.msk [vmem:[%s1575] sm:$0x3] %vm608, %v1567
        %v1577 = vld [vmem:[#allocation2] sm:$0x3]
        %v1578 = vld [vmem:[#allocation3] sm:$0x3]
        %v1579 = vmul.f32 %v1577, %v605
        %v1580 = vsel %vm608, %v1579, 0.0
        %1581 = vadd.xlane.f32.xlu0 %v1580
        %v1582 = vpop.xlane.xlu0 %1581
        %v1583 = vadd.f32 %v1582, %v616
        %1585 = vset.pattern.permute.xlu0 0
        %1586 = vperm.xlu0 %1585, %v1583
        %v1587 = vpop.permute.xlu0 %1586
        %v1589 = vadd.f32 %v585, %v1587
        %v1590 = vsel %vm625, %v1589, -inf
        %1591 = vmax.xlane.f32.xlu0 %v1590
        %v1592 = vpop.xlane.xlu0 %1591
        %v1593 = vsub.f32 %v1589, %v1592
        %v1594 = vmul.f32 %v1593, 1.442695
        %v1595 = vpow.pop %v1594
        %v1596 = vsel %vm625, %v1595, 0.0
        %1597 = vadd.xlane.f32.xlu0 %v1596
        %v1598 = vpop.xlane.xlu0 %1597
        %v1599 = vrcp.pop %v1598
        %v1600 = vmul.f32 %v1595, %v1599
        %v1601 = vlaneseq
        %v1602 = vshrl.u32 %v1601, 7
        %v1603 = vsub.s32 0, %v1602
        %v1604 = vrot.slane %v1600, %v1603
        %1606 = vbcast.lane.b32.xlu0 %v1604, 256
        %v1607 = vpop.permute.xlu0 %1606
        %v1608 = vlaneseq
        %v1609 = vshrl.u32 %v1608, 7
        %v1610 = vsub.s32 1, %v1609
        %v1611 = vrot.slane %v1600, %v1610
        %1613 = vbcast.lane.b32.xlu0 %v1611, 256
        %v1614 = vpop.permute.xlu0 %1613
        %v1615 = vmul.f32 %v1607, %v583
        %v1616 = vmul.f32 %v1614, %v584
        %v1617 = vsel %vm653, %v1615, 0.0
        %v1618 = vrot.slane %v1617, 4
        %v1619 = vadd.f32 %v1617, %v1618
        %v1620 = vrot.slane %v1619, 2
        %v1621 = vadd.f32 %v1619, %v1620
        %v1622 = vrot.slane %v1621, 1
        %v1623 = vadd.f32 %v1621, %v1622
        %v1624 = vsel %vm653, %v1616, 0.0
        %v1625 = vrot.slane %v1624, 4
        %v1626 = vadd.f32 %v1624, %v1625
        %v1627 = vrot.slane %v1626, 2
        %v1628 = vadd.f32 %v1626, %v1627
        %v1629 = vrot.slane %v1628, 1
        %v1630 = vadd.f32 %v1628, %v1629
        %s1631 = scalar_lea.vmem %s504, 6 [#allocation10]
        %v1632 = vld [vmem:[%s1631] sm:$0x3]
        %v1634 = vsel %vm669, %v1632, 0
        %1636 = vmatprep.subr.mxu0 0.0
        %1637 = vmatpush1.msra.mxu0 %v592
        %1638 = vmatprep.subr.mxu0 0.0
        %1639 = vmatpush1.msra.mxu0 %v593
        %1640 = vmatprep.subr.mxu0 0.0
        %1641 = vmatpush1.msra.mxu0 0.0
        %1642 = vmatprep.subr.mxu0 0.0
        %1643 = vmatpush1.msra.mxu0 0.0
        %1644 = vmatprep.subr.mxu0 0.0
        %1645 = vmatpush1.msra.mxu0 0.0
        %1646 = vmatprep.subr.mxu0 0.0
        %1647 = vmatpush1.msra.mxu0 0.0
        %1648 = vmatprep.subr.mxu0 0.0
        %1649 = vmatpush1.msra.mxu0 0.0
        %1650 = vmatprep.subr.mxu0 0.0
        %1651 = vmatpush1.msra.mxu0 0.0
        %1652 = vmatprep.subr.mxu0 0.0
        %1653 = vmatpush1.msra.mxu0 0.0
        %1654 = vmatprep.subr.mxu0 0.0
        %1655 = vmatpush1.msra.mxu0 0.0
        %1656 = vmatprep.subr.mxu0 0.0
        %1657 = vmatpush1.msra.mxu0 0.0
        %1658 = vmatprep.subr.mxu0 0.0
        %1659 = vmatpush1.msra.mxu0 0.0
        %1660 = vmatprep.subr.mxu0 0.0
        %1661 = vmatpush1.msra.mxu0 0.0
        %1662 = vmatprep.subr.mxu0 0.0
        %1663 = vmatpush1.msra.mxu0 0.0
        %1664 = vmatprep.subr.mxu0 0.0
        %1665 = vmatpush1.msra.mxu0 0.0
        %1666 = vmatprep.subr.mxu0 0.0
        %1667 = vmatpush1.msra.mxu0 0.0
        %1668 = vmatprep.subr.mxu0 0.0
        %1669 = vmatpush1.msra.mxu0 0.0
        %1670 = vmatprep.subr.mxu0 0.0
        %1671 = vmatpush1.msra.mxu0 0.0
        %1672 = vmatprep.subr.mxu0 0.0
        %1673 = vmatpush1.msra.mxu0 0.0
        %1674 = vmatprep.subr.mxu0 0.0
        %1675 = vmatpush1.msra.mxu0 0.0
        %1676 = vmatprep.subr.mxu0 0.0
        %1677 = vmatpush1.msra.mxu0 0.0
        %1678 = vmatprep.subr.mxu0 0.0
        %1679 = vmatpush1.msra.mxu0 0.0
        %1680 = vmatprep.subr.mxu0 0.0
        %1681 = vmatpush1.msra.mxu0 0.0
        %1682 = vmatprep.subr.mxu0 0.0
        %1683 = vmatpush1.msra.mxu0 0.0
        %1684 = vmatprep.subr.mxu0 0.0
        %1685 = vmatpush1.msra.mxu0 0.0
        %1686 = vmatprep.subr.mxu0 0.0
        %1687 = vmatpush1.msra.mxu0 0.0
        %1688 = vmatprep.subr.mxu0 0.0
        %1689 = vmatpush1.msra.mxu0 0.0
        %1690 = vmatprep.subr.mxu0 0.0
        %1691 = vmatpush1.msra.mxu0 0.0
        %1692 = vmatprep.subr.mxu0 0.0
        %1693 = vmatpush1.msra.mxu0 0.0
        %1694 = vmatprep.subr.mxu0 0.0
        %1695 = vmatpush1.msra.mxu0 0.0
        %1696 = vmatprep.subr.mxu0 0.0
        %1697 = vmatpush1.msra.mxu0 0.0
        %1698 = vmatprep.subr.mxu0 0.0
        %1699 = vmatpush1.msra.mxu0 0.0
        %1700 = vmatprep.mubr.f32.mxu0 0.0
        %1701 = vmatmul.mubr.f32.gmra.mrb[0].mxu0 %v1634
        %v1702 = vpop.f32.mrb[0].mxu0
        %v1703 = vadd.f32 0.0, %v1702
        %v1704 = vpop.f32.mrb[0].mxu0
        %1705 = vdwg.mxu0
        %v1708 = vsel %vm745, %v1630, %v1623
        %v1709 = vsel %vm653, %v1708, 0
        %1711 = vmatprep.subr.mxu0 0.0
        %1712 = vmatpush1.msra.mxu0 %v588
        %1713 = vmatprep.subr.mxu0 0.0
        %1714 = vmatpush1.msra.mxu0 %v589
        %1715 = vmatprep.subr.mxu0 0.0
        %1716 = vmatpush1.msra.mxu0 %v590
        %1717 = vmatprep.subr.mxu0 0.0
        %1718 = vmatpush1.msra.mxu0 %v591
        %1719 = vmatprep.subr.mxu0 0.0
        %1720 = vmatpush1.msra.mxu0 0.0
        %1721 = vmatprep.subr.mxu0 0.0
        %1722 = vmatpush1.msra.mxu0 0.0
        %1723 = vmatprep.subr.mxu0 0.0
        %1724 = vmatpush1.msra.mxu0 0.0
        %1725 = vmatprep.subr.mxu0 0.0
        %1726 = vmatpush1.msra.mxu0 0.0
        %1727 = vmatprep.subr.mxu0 0.0
        %1728 = vmatpush1.msra.mxu0 0.0
        %1729 = vmatprep.subr.mxu0 0.0
        %1730 = vmatpush1.msra.mxu0 0.0
        %1731 = vmatprep.subr.mxu0 0.0
        %1732 = vmatpush1.msra.mxu0 0.0
        %1733 = vmatprep.subr.mxu0 0.0
        %1734 = vmatpush1.msra.mxu0 0.0
        %1735 = vmatprep.subr.mxu0 0.0
        %1736 = vmatpush1.msra.mxu0 0.0
        %1737 = vmatprep.subr.mxu0 0.0
        %1738 = vmatpush1.msra.mxu0 0.0
        %1739 = vmatprep.subr.mxu0 0.0
        %1740 = vmatpush1.msra.mxu0 0.0
        %1741 = vmatprep.subr.mxu0 0.0
        %1742 = vmatpush1.msra.mxu0 0.0
        %1743 = vmatprep.subr.mxu0 0.0
        %1744 = vmatpush1.msra.mxu0 0.0
        %1745 = vmatprep.subr.mxu0 0.0
        %1746 = vmatpush1.msra.mxu0 0.0
        %1747 = vmatprep.subr.mxu0 0.0
        %1748 = vmatpush1.msra.mxu0 0.0
        %1749 = vmatprep.subr.mxu0 0.0
        %1750 = vmatpush1.msra.mxu0 0.0
        %1751 = vmatprep.subr.mxu0 0.0
        %1752 = vmatpush1.msra.mxu0 0.0
        %1753 = vmatprep.subr.mxu0 0.0
        %1754 = vmatpush1.msra.mxu0 0.0
        %1755 = vmatprep.subr.mxu0 0.0
        %1756 = vmatpush1.msra.mxu0 0.0
        %1757 = vmatprep.subr.mxu0 0.0
        %1758 = vmatpush1.msra.mxu0 0.0
        %1759 = vmatprep.subr.mxu0 0.0
        %1760 = vmatpush1.msra.mxu0 0.0
        %1761 = vmatprep.subr.mxu0 0.0
        %1762 = vmatpush1.msra.mxu0 0.0
        %1763 = vmatprep.subr.mxu0 0.0
        %1764 = vmatpush1.msra.mxu0 0.0
        %1765 = vmatprep.subr.mxu0 0.0
        %1766 = vmatpush1.msra.mxu0 0.0
        %1767 = vmatprep.subr.mxu0 0.0
        %1768 = vmatpush1.msra.mxu0 0.0
        %1769 = vmatprep.subr.mxu0 0.0
        %1770 = vmatpush1.msra.mxu0 0.0
        %1771 = vmatprep.subr.mxu0 0.0
        %1772 = vmatpush1.msra.mxu0 0.0
        %1773 = vmatprep.subr.mxu0 0.0
        %1774 = vmatpush1.msra.mxu0 0.0
        %1775 = vmatprep.mubr.f32.mxu0 0.0
        %1776 = vmatmul.mubr.f32.gmra.mrb[0].mxu0 %v1709
        %v1777 = vpop.f32.mrb[0].mxu0
        %v1778 = vadd.f32 %v1703, %v1777
        %v1779 = vpop.f32.mrb[0].mxu0
        %1780 = vdwg.mxu0
        %v1782 = vsel %vm653, %v1577, 0
        %1784 = vmatprep.subr.mxu0 0.0
        %1785 = vmatpush1.msra.mxu0 %v594
        %1786 = vmatprep.subr.mxu0 0.0
        %1787 = vmatpush1.msra.mxu0 %v595
        %1788 = vmatprep.subr.mxu0 0.0
        %1789 = vmatpush1.msra.mxu0 %v596
        %1790 = vmatprep.subr.mxu0 0.0
        %1791 = vmatpush1.msra.mxu0 %v597
        %1792 = vmatprep.subr.mxu0 0.0
        %1793 = vmatpush1.msra.mxu0 0.0
        %1794 = vmatprep.subr.mxu0 0.0
        %1795 = vmatpush1.msra.mxu0 0.0
        %1796 = vmatprep.subr.mxu0 0.0
        %1797 = vmatpush1.msra.mxu0 0.0
        %1798 = vmatprep.subr.mxu0 0.0
        %1799 = vmatpush1.msra.mxu0 0.0
        %1800 = vmatprep.subr.mxu0 0.0
        %1801 = vmatpush1.msra.mxu0 0.0
        %1802 = vmatprep.subr.mxu0 0.0
        %1803 = vmatpush1.msra.mxu0 0.0
        %1804 = vmatprep.subr.mxu0 0.0
        %1805 = vmatpush1.msra.mxu0 0.0
        %1806 = vmatprep.subr.mxu0 0.0
        %1807 = vmatpush1.msra.mxu0 0.0
        %1808 = vmatprep.subr.mxu0 0.0
        %1809 = vmatpush1.msra.mxu0 0.0
        %1810 = vmatprep.subr.mxu0 0.0
        %1811 = vmatpush1.msra.mxu0 0.0
        %1812 = vmatprep.subr.mxu0 0.0
        %1813 = vmatpush1.msra.mxu0 0.0
        %1814 = vmatprep.subr.mxu0 0.0
        %1815 = vmatpush1.msra.mxu0 0.0
        %1816 = vmatprep.subr.mxu0 0.0
        %1817 = vmatpush1.msra.mxu0 0.0
        %1818 = vmatprep.subr.mxu0 0.0
        %1819 = vmatpush1.msra.mxu0 0.0
        %1820 = vmatprep.subr.mxu0 0.0
        %1821 = vmatpush1.msra.mxu0 0.0
        %1822 = vmatprep.subr.mxu0 0.0
        %1823 = vmatpush1.msra.mxu0 0.0
        %1824 = vmatprep.subr.mxu0 0.0
        %1825 = vmatpush1.msra.mxu0 0.0
        %1826 = vmatprep.subr.mxu0 0.0
        %1827 = vmatpush1.msra.mxu0 0.0
        %1828 = vmatprep.subr.mxu0 0.0
        %1829 = vmatpush1.msra.mxu0 0.0
        %1830 = vmatprep.subr.mxu0 0.0
        %1831 = vmatpush1.msra.mxu0 0.0
        %1832 = vmatprep.subr.mxu0 0.0
        %1833 = vmatpush1.msra.mxu0 0.0
        %1834 = vmatprep.subr.mxu0 0.0
        %1835 = vmatpush1.msra.mxu0 0.0
        %1836 = vmatprep.subr.mxu0 0.0
        %1837 = vmatpush1.msra.mxu0 0.0
        %1838 = vmatprep.subr.mxu0 0.0
        %1839 = vmatpush1.msra.mxu0 0.0
        %1840 = vmatprep.subr.mxu0 0.0
        %1841 = vmatpush1.msra.mxu0 0.0
        %1842 = vmatprep.subr.mxu0 0.0
        %1843 = vmatpush1.msra.mxu0 0.0
        %1844 = vmatprep.subr.mxu0 0.0
        %1845 = vmatpush1.msra.mxu0 0.0
        %1846 = vmatprep.subr.mxu0 0.0
        %1847 = vmatpush1.msra.mxu0 0.0
        %1848 = vmatprep.mubr.f32.mxu0 0.0
        %1849 = vmatmul.mubr.f32.gmra.mrb[0].mxu0 %v1782
        %v1850 = vpop.f32.mrb[0].mxu0
        %v1851 = vadd.f32 0.0, %v1850
        %v1852 = vpop.f32.mrb[0].mxu0
        %1853 = vdwg.mxu0
        %v1854 = vadd.f32 %v1778, %v1851
        %v1855 = vadd.f32 %v1854, %v897
        %v1856 = vxor.u32 %v1855, 2147483648
        %v1857 = vmul.f32 %v1856, 1.442695
        %v1858 = vpow.pop %v1857
        %v1859 = vadd.f32 %v1858, 1.0
        %v1860 = vrcp.pop %v1859
        %v1861 = vmul.f32 1.0, %v1860
        %v1862 = vtanh.pop %v1855
        %1864 = vrot.lane.b32.xlu0 %v1578, 32
        %v1865 = vpop.permute.xlu0 %1864
        %v1867 = vmul.f32 %v1861, %v1865
        %1869 = vrot.lane.b32.xlu0 %v1862, 64
        %v1870 = vpop.permute.xlu0 %1869
        %v1872 = vmul.f32 %v1861, %v1870
        %1874 = vrot.lane.b32.xlu0 %v1872, 32
        %v1875 = vpop.permute.xlu0 %1874
        %v1877 = vadd.f32 %v1867, %v1875
        %v1878 = vtanh.pop %v1877
        %1880 = vrot.lane.b32.xlu0 %v1878, 64
        %v1881 = vpop.permute.xlu0 %1880
        %v1883 = vmul.f32 %v1861, %v1881
        %1885 = vrot.lane.b32.xlu0 %v1883, 32
        %v1886 = vpop.permute.xlu0 %1885
        %1888 = vst.msk [vmem:[#allocation2] sm:$0x3] %vm608, %v1886
        %1890 = vrot.lane.b32.xlu0 %v1877, 96
        %v1891 = vpop.permute.xlu0 %1890
        %1893 = vst.msk [vmem:[#allocation3] sm:$0x3] %vm608, %v1891
        %s1894 = scalar_lea.vmem %s570, 6 [#allocation21]
        %1895 = vst.msk [vmem:[%s1894] sm:$0x3] %vm608, %v1886
        %s1896 = sand.u32 %s312, 1
        %s1897 = scalar_lea.sflag [#allocation7], %s1896
        %s1898 = sand.u32 %s312, 1
        %s1899 = smul.addr %s1898, 8
        %s1900 = scalar_lea.vmem [#allocation21], %s1899
        // Predicated region
        $region109: #{tpu_custom_call.1} parent=63 // pred_check
          %p1901 = pneg %p322
        $region110: #{tpu_custom_call.1} parent=63 // pred_check_branch
          %1903 = sbr.rel (%p1901) target = $region112
        $region111: #{tpu_custom_call.1} parent=63 // pred_region
          %s1904 = smul.u32 4, %s37
          %s1906 = ssub.s32 128, 128
          %1907 = vsyncadd %s1897, %s1906
          %s1908 = sadd.s32 %s36, %s1904
          %s1909 = smul.addr %s1908, 32
          %s1910 = scalar_lea.hbm %s11, %s1909
          %s1911 = sshll.u32 %s1900, 4
          %s1912 = int_to_ptr.vmem [resolvable:$true] %s1911
          %1917 = dma.vmem_to_hbm [thread:$0]  %s1912, 128, %s1910, %s1897, 32, 32, 2
        $region112: #{tpu_custom_call.1} parent=63 // pred_fallthru
          _
      $region64: #{tpu_custom_call.1} parent=5 // pred_fallthru
        _
      %p1918 = scmp.le.s32.totalorder 2, %s27
      // Predicated region
      $region113: #{tpu_custom_call.1} parent=5 // pred_check
        %p1919 = pneg %p1918
      $region114: #{tpu_custom_call.1} parent=5 // pred_check_branch
        %1921 = sbr.rel (%p1919) target = $region116
      $region115: #{tpu_custom_call.1} parent=5 // pred_region
        %s1922 = ssub.s32 %s27, 2
        // Predicated region
        $region117: #{tpu_custom_call.1} parent=115 // pred_check
          %p1923 = pneg %p328
        $region118: #{tpu_custom_call.1} parent=115 // pred_check_branch
          %1925 = sbr.rel (%p1923) target = $region120
        $region119: #{tpu_custom_call.1} parent=115 // pred_region
          %s1926 = sand.u32 %s313, 1
          %s1927 = scalar_lea.sflag [#allocation7], %s1926
          %s1928 = sand.u32 %s313, 1
          %s1929 = smul.addr %s1928, 8
          %s1930 = scalar_lea.vmem [#allocation21], %s1929
          %1931 = dma.done %s1927, 128
        $region120: #{tpu_custom_call.1} parent=115 // pred_fallthru
          _
      $region116: #{tpu_custom_call.1} parent=5 // pred_fallthru
        _
    $region6: #{tpu_custom_call.1} parent=1 // loop_footer
      %s31 = sadd.s32 1, %s27
    $region7: #{tpu_custom_call.1} parent=1 // loop_footer_branch
      %26 = sbr.rel target = $region3
    $region8: #{tpu_custom_call.1} parent=1 // loop_exit
      _
    %1932 = vsyncpa [#allocation6], 1
    %s1933 = scalar_lea.sflag [#allocation6], 1
    %1934 = vsyncpa %s1933, 1
    %1935 = vsyncpa [#allocation9], 1
    %1936 = vsyncpa [#allocation13], 1
    %1937 = vsyncpa [#allocation16], 1
    %1938 = vsyncpa [#allocation19], 1
    %1939 = vsyncpa [#allocation7], 1
    %s1940 = scalar_lea.sflag [#allocation7], 1
    %1941 = vsyncpa %s1940, 1

</llo_original>
